<compile_context>
chip_gen: v6e
topology: v6e:2x2x1
jax: 0.10.0
libtpu: 0.0.40
codegen_flags: <defaults>
</compile_context>

<pallas_src>
import jax
import jax.numpy as jnp
from jax.experimental import pallas as pl
from jax.experimental.pallas import tpu as pltpu

FC_SIZE = 256
OUT_DIM = 3
OUT_PAD = 128                       # lane-dense padded output width
BN_EPS = 1e-5
LANE = 128
SLAB_LIMIT_BYTES = 4 * 1024 * 1024  # per-grid-step bert staging gate (fits v7x VMEM)


def _round_up(x, m):
    return (x + m - 1) // m * m


# ----------------------------------------------------------------------------
# Parameters
# ----------------------------------------------------------------------------
def make_raw_params(key, hidden_size):
    """Raw parameters mirroring the torch module's __init__ (eval mode)."""
    def kaiming(k, fan_in, fan_out):
        # nn.init.kaiming_normal_: std = sqrt(2 / fan_in).  Stored (in, out).
        std = (2.0 / fan_in) ** 0.5
        return jax.random.normal(k, (fan_in, fan_out), jnp.float32) * std

    def bn(dim):
        return dict(
            gamma=jnp.ones((dim,), jnp.float32),
            beta=jnp.zeros((dim,), jnp.float32),
            mean=jnp.zeros((dim,), jnp.float32),
            var=jnp.ones((dim,), jnp.float32),
        )

    in0 = 7 * hidden_size
    k1, k2, k3, k4 = jax.random.split(key, 4)
    return {
        "bn0": bn(in0), "w1": kaiming(k1, in0, FC_SIZE), "b1": jnp.zeros((FC_SIZE,), jnp.float32),
        "bn1": bn(FC_SIZE), "w2": kaiming(k2, FC_SIZE, FC_SIZE), "b2": jnp.zeros((FC_SIZE,), jnp.float32),
        "bn2": bn(FC_SIZE), "w3": kaiming(k3, FC_SIZE, FC_SIZE), "b3": jnp.zeros((FC_SIZE,), jnp.float32),
        "bn3": bn(FC_SIZE), "w4": kaiming(k4, FC_SIZE, OUT_DIM), "b4": jnp.zeros((OUT_DIM,), jnp.float32),
    }


def fold_params(raw, hidden_size):
    """Prepare kernel parameters from eval-mode raw parameters.

    BN0: scale kept separate (applied to f32 features in-kernel, no bf16 weight
         amplification when running_var is tiny); shift folded into b1 (exact).
    BN1-3: folded into w2/w3/w4 (h*s+t then h@W+b == h@(s[:,None]*W) + (t@W+b)).
    W1 is zero-padded to a lane-dense K (round_up(7H, 128)); final layer padded
    to 128 output columns.  Weights stored bf16 (MXU operands only).
    """
    def fold(bn, w, b):
        s = bn["gamma"] / jnp.sqrt(bn["var"] + BN_EPS)
        t = bn["beta"] - bn["mean"] * s
        return s[:, None] * w, t @ w + b

    in0 = 7 * hidden_size
    k_pad = _round_up(in0, LANE)

    s0 = raw["bn0"]["gamma"] / jnp.sqrt(raw["bn0"]["var"] + BN_EPS)
    t0 = raw["bn0"]["beta"] - raw["bn0"]["mean"] * s0
    b1 = t0 @ raw["w1"] + raw["b1"]
    w1p = jnp.zeros((k_pad, FC_SIZE), jnp.float32).at[:in0, :].set(raw["w1"])
    s1p = jnp.zeros((1, k_pad), jnp.float32).at[0, :in0].set(s0)

    w2, b2 = fold(raw["bn1"], raw["w2"], raw["b2"])
    w3, b3 = fold(raw["bn2"], raw["w3"], raw["b3"])
    w4, b4 = fold(raw["bn3"], raw["w4"], raw["b4"])
    w4p = jnp.zeros((FC_SIZE, OUT_PAD), jnp.float32).at[:, :OUT_DIM].set(w4)
    b4p = jnp.zeros((OUT_PAD,), jnp.float32).at[:OUT_DIM].set(b4)

    return {
        "s1": s1p,                                   # (1, K_pad) f32 BN0 scale
        "w1": w1p.astype(jnp.bfloat16), "b1": b1.reshape(1, FC_SIZE),
        "w2": w2.astype(jnp.bfloat16), "b2": b2.reshape(1, FC_SIZE),
        "w3": w3.astype(jnp.bfloat16), "b3": b3.reshape(1, FC_SIZE),
        "w4": w4p.astype(jnp.bfloat16), "b4": b4p.reshape(1, OUT_PAD),
    }


# ----------------------------------------------------------------------------
# Pallas kernel + wrapper
# ----------------------------------------------------------------------------
def head_forward(bert_outputs, offsets, params, *, batch_tile=None):
    """bert_outputs: (B, S, H) f32; offsets: (B, 5) int32 -> (B, 3) f32 logits."""
    B, S, H = bert_outputs.shape
    TB = batch_tile if batch_tile is not None else B
    assert B % TB == 0, "batch_tile must divide the batch"
    n_steps = B // TB
    K_pad = params["w1"].shape[0]
    assert K_pad == _round_up(7 * H, LANE)

    # Sentinel / out-of-range guard (e.g. -1 for padded spans): an OOB row read
    # is silent-or-fatal on TPU, so clamp before the kernel.
    offsets = jnp.clip(offsets.astype(jnp.int32), 0, S - 1)

    itemsize = jnp.dtype(bert_outputs.dtype).itemsize
    use_slab = TB * S * H * itemsize <= SLAB_LIMIT_BYTES

    bert_flat = bert_outputs.reshape(B * S, H)   # free reshape; row = b*S + off

    def kernel(off_ref, bert_ref, s1_ref, w1_ref, b1_ref, w2_ref, b2_ref,
               w3_ref, b3_ref, w4_ref, b4_ref, out_ref, gat_ref, feat_ref,
               *maybe_sem):
        i = pl.program_id(0)

        # ---- gather: 5 rows per batch element -> gat_ref (5, TB, H) -------
        if use_slab:
            # bert_ref is this batch tile's (TB*S, H) slab, staged to VMEM by
            # the BlockSpec pipeline with a single DMA; rows are read with
            # dynamic sublane slices — no per-row DMA descriptors at all.
            for b in range(TB):
                gb = i * TB + b
                for j in range(5):             # [start0, end0, start1, end1, cls]
                    t = off_ref[gb, j]
                    gat_ref[j, b:b + 1, :] = bert_ref[pl.ds(b * S + t, 1), :]
        else:
            # Long-sequence fallback: bert stays in HBM; per-row DMAs share a
            # single semaphore (all copies have identical (1, H) shape).
            sem_ref = maybe_sem[0]
            copies = []
            for b in range(TB):
                gb = i * TB + b
                for j in range(5):
                    t = off_ref[gb, j]
                    cp = pltpu.make_async_copy(
                        bert_ref.at[pl.ds(gb * S + t, 1), :],
                        gat_ref.at[j, b:b + 1, :],
                        sem_ref.at[0])
                    cp.start()
                    copies.append(cp)
            for cp in copies:
                cp.wait()

        f32 = jnp.float32
        x0 = gat_ref[0].astype(f32)
        y0 = gat_ref[1].astype(f32)
        x1 = gat_ref[2].astype(f32)
        y1 = gat_ref[3].astype(f32)
        cls_tok = gat_ref[4].astype(f32)

        # ---- layer 1 as ONE K-contiguous matmul ----------------------------
        # Torch feature order: [x0, y0, x0*y0, x1, y1, x1*y1, cls].  The (TB,7H)
        # concat only exists in a lane-dense padded VMEM scratch, never in HBM.
        pad = K_pad - 7 * H
        if pad:
            feat_ref[:, 7 * H:K_pad] = jnp.zeros((TB, pad), f32)
        for k, piece in enumerate((x0, y0, x0 * y0, x1, y1, x1 * y1, cls_tok)):
            feat_ref[:, k * H:(k + 1) * H] = piece
        # BN0 scale on f32 features (exact; shift folded into b1).  Padded tail
        # of s1 is zero, padded rows of w1 are zero.
        feat = feat_ref[...] * s1_ref[...]

        def mm(a, w):   # bf16 MXU operands (one cast per layer), f32 accumulate
            return jnp.dot(a.astype(jnp.bfloat16), w,
                           preferred_element_type=jnp.float32)

        h = jnp.maximum(mm(feat, w1_ref[...]) + b1_ref[...], 0.0)
        h = jnp.maximum(mm(h, w2_ref[...]) + b2_ref[...], 0.0)
        h = jnp.maximum(mm(h, w3_ref[...]) + b3_ref[...], 0.0)
        out_ref[...] = mm(h, w4_ref[...]) + b4_ref[...]     # lane-dense (TB, 128)

    def _const_spec(arr):
        zeros = (0,) * arr.ndim
        return pl.BlockSpec(arr.shape, lambda i, off, _z=zeros: _z)

    if use_slab:
        bert_spec = pl.BlockSpec((TB * S, H), lambda i, off: (i, 0))
    else:
        bert_spec = pl.BlockSpec(memory_space=pl.ANY)

    weight_names = ("s1", "w1", "b1", "w2", "b2", "w3", "b3", "w4", "b4")
    weight_args = [params[n] for n in weight_names]
    in_specs = [bert_spec] + [_const_spec(p) for p in weight_args]
    out_spec = pl.BlockSpec((TB, OUT_PAD), lambda i, off: (i, 0))

    scratch_shapes = [
        pltpu.VMEM((5, TB, H), bert_outputs.dtype),   # gathered endpoint/cls rows
        pltpu.VMEM((TB, K_pad), jnp.float32),         # lane-dense 7H feature slab
    ]
    if not use_slab:
        scratch_shapes.append(pltpu.SemaphoreType.DMA((1,)))

    flops = 2 * B * (K_pad * FC_SIZE + 2 * FC_SIZE * FC_SIZE + FC_SIZE * OUT_PAD)
    bytes_accessed = int(
        sum(int(v.size) * jnp.dtype(v.dtype).itemsize for v in weight_args)
        + (B * S * H if use_slab else 5 * B * H) * itemsize
        + B * OUT_PAD * 4 + offsets.size * 4)

    out = pl.pallas_call(
        kernel,
        out_shape=jax.ShapeDtypeStruct((B, OUT_PAD), jnp.float32),
        grid_spec=pltpu.PrefetchScalarGridSpec(
            num_scalar_prefetch=1,
            grid=(n_steps,),
            in_specs=in_specs,
            out_specs=out_spec,
            scratch_shapes=scratch_shapes),
        compiler_params=pltpu.CompilerParams(
            dimension_semantics=("parallel",),        # batch tiles -> 2 TCs on v7x
            vmem_limit_bytes=32 * 1024 * 1024),
        cost_estimate=pl.CostEstimate(
            flops=flops, transcendentals=0, bytes_accessed=bytes_accessed),
    )(offsets, bert_flat, *weight_args)

    return out[:, :OUT_DIM]


# ----------------------------------------------------------------------------
# Pure-JAX references
# ----------------------------------------------------------------------------
def head_forward_folded_ref(bert_outputs, offsets, p):
    """Mirrors the kernel's folded / bf16 math exactly (tight tolerance)."""
    B, S, H = bert_outputs.shape
    offsets = jnp.clip(offsets, 0, S - 1)
    b_idx = jnp.arange(B)
    g = lambda col: bert_outputs[b_idx, offsets[:, col]]
    x0, y0, x1, y1, c = (g(i) for i in range(5))

    k_pad = p["w1"].shape[0]
    pieces = [x0, y0, x0 * y0, x1, y1, x1 * y1, c]
    pad = k_pad - 7 * H
    if pad:
        pieces.append(jnp.zeros((B, pad), jnp.float32))
    feat = jnp.concatenate(pieces, axis=-1) * p["s1"]

    def mm(a, w):
        return jnp.dot(a.astype(jnp.bfloat16), w, preferred_element_type=jnp.float32)

    h = jnp.maximum(mm(feat, p["w1"]) + p["b1"], 0.0)
    h = jnp.maximum(mm(h, p["w2"]) + p["b2"], 0.0)
    h = jnp.maximum(mm(h, p["w3"]) + p["b3"], 0.0)
    return (mm(h, p["w4"]) + p["b4"])[:, :OUT_DIM]


def head_forward_raw_ref(bert_outputs, offsets, raw):
    """Straight transcription of the torch module (eval mode, f32)."""
    B = bert_outputs.shape[0]
    b_idx = jnp.arange(B)
    g = lambda col: bert_outputs[b_idx, offsets[:, col]]
    x0, y0, x1, y1, c = (g(i) for i in range(5))
    feat = jnp.concatenate([x0, y0, x0 * y0, x1, y1, x1 * y1, c], axis=-1)

    def bn(p, h):
        return (h - p["mean"]) / jnp.sqrt(p["var"] + BN_EPS) * p["gamma"] + p["beta"]

    h = bn(raw["bn0"], feat)                      # Dropout: identity in eval mode
    h = jnp.maximum(h @ raw["w1"] + raw["b1"], 0.0)
    h = bn(raw["bn1"], h)
    h = jnp.maximum(h @ raw["w2"] + raw["b2"], 0.0)
    h = bn(raw["bn2"], h)
    h = jnp.maximum(h @ raw["w3"] + raw["b3"], 0.0)
    h = bn(raw["bn3"], h)
    return h @ raw["w4"] + raw["b4"]


# ----------------------------------------------------------------------------
if __name__ == "__main__":
    B, S, H = 16, 16, 32   # batch, sequence length, bert_hidden_size (toy)

    key = jax.random.PRNGKey(0)
    k_x, k_off, k_par = jax.random.split(key, 3)

    bert_outputs = jax.random.normal(k_x, (B, S, H), jnp.float32)
    offsets = jax.random.randint(k_off, (B, 5), 0, S, dtype=jnp.int32)

    raw = make_raw_params(k_par, H)
    params = fold_params(raw, H)

    # batch_tile=8 -> grid=(2,), parallel batch tiles (both TCs on v7x).
    out = head_forward(bert_outputs, offsets, params, batch_tile=8)
    out = jax.block_until_ready(out)
    assert out.shape == (B, OUT_DIM)

    # 1) Tight check against a reference mirroring the kernel's folded/bf16 math.
    ref_folded = head_forward_folded_ref(bert_outputs, offsets, params)
    assert jnp.allclose(out, ref_folded, atol=1e-3, rtol=1e-3), (
        jnp.max(jnp.abs(out - ref_folded)))

    # 2) Loose check against the raw f32 torch-equivalent math (bf16 rounding).
    ref_raw = head_forward_raw_ref(bert_outputs, offsets, raw)
    assert jnp.allclose(out, ref_raw, atol=5e-2, rtol=5e-2), (
        jnp.max(jnp.abs(out - ref_raw)))

    print("KERNEL_OK")
</pallas_src>

<mosaic_0001>
module attributes {stable_mosaic.version = 11 : i64} {
  func.func @kernel(%arg0: i32, %arg1: memref<16x5xi32, #tpu.memory_space<smem>>, %arg2: memref<128x32xf32, #tpu.memory_space<vmem>>, %arg3: memref<1x256xf32, #tpu.memory_space<vmem>>, %arg4: memref<256x256xbf16, #tpu.memory_space<vmem>>, %arg5: memref<1x256xf32, #tpu.memory_space<vmem>>, %arg6: memref<256x256xbf16, #tpu.memory_space<vmem>>, %arg7: memref<1x256xf32, #tpu.memory_space<vmem>>, %arg8: memref<256x256xbf16, #tpu.memory_space<vmem>>, %arg9: memref<1x256xf32, #tpu.memory_space<vmem>>, %arg10: memref<256x128xbf16, #tpu.memory_space<vmem>>, %arg11: memref<1x128xf32, #tpu.memory_space<vmem>>, %arg12: memref<8x128xf32, #tpu.memory_space<vmem>>, %arg13: memref<5x8x32xf32, #tpu.memory_space<vmem>>, %arg14: memref<8x256xf32, #tpu.memory_space<vmem>>) attributes {dimension_semantics = [#tpu.dimension_semantics<parallel>], iteration_bounds = array<i64: 2>, scalar_prefetch = 1 : i64, scratch_operands = 2 : i64, tpu.core_type = #tpu.core_type<tc>, window_params = [{transform_indices = @transform_0, window_bounds = array<i64: 128, 32>}, {pipeline_mode = #tpu.pipeline_mode<synchronous>, transform_indices = @transform_1, window_bounds = array<i64: 1, 256>}, {pipeline_mode = #tpu.pipeline_mode<synchronous>, transform_indices = @transform_2, window_bounds = array<i64: 256, 256>}, {pipeline_mode = #tpu.pipeline_mode<synchronous>, transform_indices = @transform_3, window_bounds = array<i64: 1, 256>}, {pipeline_mode = #tpu.pipeline_mode<synchronous>, transform_indices = @transform_4, window_bounds = array<i64: 256, 256>}, {pipeline_mode = #tpu.pipeline_mode<synchronous>, transform_indices = @transform_5, window_bounds = array<i64: 1, 256>}, {pipeline_mode = #tpu.pipeline_mode<synchronous>, transform_indices = @transform_6, window_bounds = array<i64: 256, 256>}, {pipeline_mode = #tpu.pipeline_mode<synchronous>, transform_indices = @transform_7, window_bounds = array<i64: 1, 256>}, {pipeline_mode = #tpu.pipeline_mode<synchronous>, transform_indices = @transform_8, window_bounds = array<i64: 256, 128>}, {pipeline_mode = #tpu.pipeline_mode<synchronous>, transform_indices = @transform_9, window_bounds = array<i64: 1, 128>}, {transform_indices = @transform_10, window_bounds = array<i64: 8, 128>}]} {
    %c8_i32 = arith.constant 8 : i32
    %0 = arith.muli %arg0, %c8_i32 : i32
    %c0_i32 = arith.constant 0 : i32
    %1 = arith.addi %0, %c0_i32 : i32
    %2 = arith.index_cast %1 : i32 to index
    %c0 = arith.constant 0 : index
    %3 = memref.load %arg1[%2, %c0] : memref<16x5xi32, #tpu.memory_space<smem>>
    %c0_i32_0 = arith.constant 0 : i32
    %4 = arith.addi %c0_i32_0, %3 : i32
    %5 = arith.index_cast %4 : i32 to index
    %c0_1 = arith.constant 0 : index
    %6 = vector.load %arg2[%5, %c0_1] : memref<128x32xf32, #tpu.memory_space<vmem>>, vector<1x32xf32>
    %c0_2 = arith.constant 0 : index
    %c0_3 = arith.constant 0 : index
    %c0_4 = arith.constant 0 : index
    %7 = vector.load %arg13[%c0_2, %c0_3, %c0_4] : memref<5x8x32xf32, #tpu.memory_space<vmem>>, vector<1x1x32xf32>
    %8 = vector.shape_cast %7 : vector<1x1x32xf32> to vector<1x32xf32>
    %9 = vector.shape_cast %6 : vector<1x32xf32> to vector<1x1x32xf32>
    tpu.vector_store %arg13[%c0_2, %c0_3, %c0_4], %9 {strides = array<i32>} : memref<5x8x32xf32, #tpu.memory_space<vmem>>, vector<1x1x32xf32>,
    %10 = arith.index_cast %1 : i32 to index
    %c1 = arith.constant 1 : index
    %11 = memref.load %arg1[%10, %c1] : memref<16x5xi32, #tpu.memory_space<smem>>
    %c0_i32_5 = arith.constant 0 : i32
    %12 = arith.addi %c0_i32_5, %11 : i32
    %13 = arith.index_cast %12 : i32 to index
    %c0_6 = arith.constant 0 : index
    %14 = vector.load %arg2[%13, %c0_6] : memref<128x32xf32, #tpu.memory_space<vmem>>, vector<1x32xf32>
    %c1_7 = arith.constant 1 : index
    %c0_8 = arith.constant 0 : index
    %c0_9 = arith.constant 0 : index
    %15 = vector.load %arg13[%c1_7, %c0_8, %c0_9] : memref<5x8x32xf32, #tpu.memory_space<vmem>>, vector<1x1x32xf32>
    %16 = vector.shape_cast %15 : vector<1x1x32xf32> to vector<1x32xf32>
    %17 = vector.shape_cast %14 : vector<1x32xf32> to vector<1x1x32xf32>
    tpu.vector_store %arg13[%c1_7, %c0_8, %c0_9], %17 {strides = array<i32>} : memref<5x8x32xf32, #tpu.memory_space<vmem>>, vector<1x1x32xf32>,
    %18 = arith.index_cast %1 : i32 to index
    %c2 = arith.constant 2 : index
    %19 = memref.load %arg1[%18, %c2] : memref<16x5xi32, #tpu.memory_space<smem>>
    %c0_i32_10 = arith.constant 0 : i32
    %20 = arith.addi %c0_i32_10, %19 : i32
    %21 = arith.index_cast %20 : i32 to index
    %c0_11 = arith.constant 0 : index
    %22 = vector.load %arg2[%21, %c0_11] : memref<128x32xf32, #tpu.memory_space<vmem>>, vector<1x32xf32>
    %c2_12 = arith.constant 2 : index
    %c0_13 = arith.constant 0 : index
    %c0_14 = arith.constant 0 : index
    %23 = vector.load %arg13[%c2_12, %c0_13, %c0_14] : memref<5x8x32xf32, #tpu.memory_space<vmem>>, vector<1x1x32xf32>
    %24 = vector.shape_cast %23 : vector<1x1x32xf32> to vector<1x32xf32>
    %25 = vector.shape_cast %22 : vector<1x32xf32> to vector<1x1x32xf32>
    tpu.vector_store %arg13[%c2_12, %c0_13, %c0_14], %25 {strides = array<i32>} : memref<5x8x32xf32, #tpu.memory_space<vmem>>, vector<1x1x32xf32>,
    %26 = arith.index_cast %1 : i32 to index
    %c3 = arith.constant 3 : index
    %27 = memref.load %arg1[%26, %c3] : memref<16x5xi32, #tpu.memory_space<smem>>
    %c0_i32_15 = arith.constant 0 : i32
    %28 = arith.addi %c0_i32_15, %27 : i32
    %29 = arith.index_cast %28 : i32 to index
    %c0_16 = arith.constant 0 : index
    %30 = vector.load %arg2[%29, %c0_16] : memref<128x32xf32, #tpu.memory_space<vmem>>, vector<1x32xf32>
    %c3_17 = arith.constant 3 : index
    %c0_18 = arith.constant 0 : index
    %c0_19 = arith.constant 0 : index
    %31 = vector.load %arg13[%c3_17, %c0_18, %c0_19] : memref<5x8x32xf32, #tpu.memory_space<vmem>>, vector<1x1x32xf32>
    %32 = vector.shape_cast %31 : vector<1x1x32xf32> to vector<1x32xf32>
    %33 = vector.shape_cast %30 : vector<1x32xf32> to vector<1x1x32xf32>
    tpu.vector_store %arg13[%c3_17, %c0_18, %c0_19], %33 {strides = array<i32>} : memref<5x8x32xf32, #tpu.memory_space<vmem>>, vector<1x1x32xf32>,
    %34 = arith.index_cast %1 : i32 to index
    %c4 = arith.constant 4 : index
    %35 = memref.load %arg1[%34, %c4] : memref<16x5xi32, #tpu.memory_space<smem>>
    %c0_i32_20 = arith.constant 0 : i32
    %36 = arith.addi %c0_i32_20, %35 : i32
    %37 = arith.index_cast %36 : i32 to index
    %c0_21 = arith.constant 0 : index
    %38 = vector.load %arg2[%37, %c0_21] : memref<128x32xf32, #tpu.memory_space<vmem>>, vector<1x32xf32>
    %c4_22 = arith.constant 4 : index
    %c0_23 = arith.constant 0 : index
    %c0_24 = arith.constant 0 : index
    %39 = vector.load %arg13[%c4_22, %c0_23, %c0_24] : memref<5x8x32xf32, #tpu.memory_space<vmem>>, vector<1x1x32xf32>
    %40 = vector.shape_cast %39 : vector<1x1x32xf32> to vector<1x32xf32>
    %41 = vector.shape_cast %38 : vector<1x32xf32> to vector<1x1x32xf32>
    tpu.vector_store %arg13[%c4_22, %c0_23, %c0_24], %41 {strides = array<i32>} : memref<5x8x32xf32, #tpu.memory_space<vmem>>, vector<1x1x32xf32>,
    %c8_i32_25 = arith.constant 8 : i32
    %42 = arith.muli %arg0, %c8_i32_25 : i32
    %c1_i32 = arith.constant 1 : i32
    %43 = arith.addi %42, %c1_i32 : i32
    %44 = arith.index_cast %43 : i32 to index
    %c0_26 = arith.constant 0 : index
    %45 = memref.load %arg1[%44, %c0_26] : memref<16x5xi32, #tpu.memory_space<smem>>
    %c16_i32 = arith.constant 16 : i32
    %46 = arith.addi %c16_i32, %45 : i32
    %47 = arith.index_cast %46 : i32 to index
    %c0_27 = arith.constant 0 : index
    %48 = vector.load %arg2[%47, %c0_27] : memref<128x32xf32, #tpu.memory_space<vmem>>, vector<1x32xf32>
    %c0_28 = arith.constant 0 : index
    %c1_29 = arith.constant 1 : index
    %c0_30 = arith.constant 0 : index
    %49 = vector.load %arg13[%c0_28, %c1_29, %c0_30] : memref<5x8x32xf32, #tpu.memory_space<vmem>>, vector<1x1x32xf32>
    %50 = vector.shape_cast %49 : vector<1x1x32xf32> to vector<1x32xf32>
    %51 = vector.shape_cast %48 : vector<1x32xf32> to vector<1x1x32xf32>
    tpu.vector_store %arg13[%c0_28, %c1_29, %c0_30], %51 {strides = array<i32>} : memref<5x8x32xf32, #tpu.memory_space<vmem>>, vector<1x1x32xf32>,
    %52 = arith.index_cast %43 : i32 to index
    %c1_31 = arith.constant 1 : index
    %53 = memref.load %arg1[%52, %c1_31] : memref<16x5xi32, #tpu.memory_space<smem>>
    %c16_i32_32 = arith.constant 16 : i32
    %54 = arith.addi %c16_i32_32, %53 : i32
    %55 = arith.index_cast %54 : i32 to index
    %c0_33 = arith.constant 0 : index
    %56 = vector.load %arg2[%55, %c0_33] : memref<128x32xf32, #tpu.memory_space<vmem>>, vector<1x32xf32>
    %c1_34 = arith.constant 1 : index
    %c1_35 = arith.constant 1 : index
    %c0_36 = arith.constant 0 : index
    %57 = vector.load %arg13[%c1_34, %c1_35, %c0_36] : memref<5x8x32xf32, #tpu.memory_space<vmem>>, vector<1x1x32xf32>
    %58 = vector.shape_cast %57 : vector<1x1x32xf32> to vector<1x32xf32>
    %59 = vector.shape_cast %56 : vector<1x32xf32> to vector<1x1x32xf32>
    tpu.vector_store %arg13[%c1_34, %c1_35, %c0_36], %59 {strides = array<i32>} : memref<5x8x32xf32, #tpu.memory_space<vmem>>, vector<1x1x32xf32>,
    %60 = arith.index_cast %43 : i32 to index
    %c2_37 = arith.constant 2 : index
    %61 = memref.load %arg1[%60, %c2_37] : memref<16x5xi32, #tpu.memory_space<smem>>
    %c16_i32_38 = arith.constant 16 : i32
    %62 = arith.addi %c16_i32_38, %61 : i32
    %63 = arith.index_cast %62 : i32 to index
    %c0_39 = arith.constant 0 : index
    %64 = vector.load %arg2[%63, %c0_39] : memref<128x32xf32, #tpu.memory_space<vmem>>, vector<1x32xf32>
    %c2_40 = arith.constant 2 : index
    %c1_41 = arith.constant 1 : index
    %c0_42 = arith.constant 0 : index
    %65 = vector.load %arg13[%c2_40, %c1_41, %c0_42] : memref<5x8x32xf32, #tpu.memory_space<vmem>>, vector<1x1x32xf32>
    %66 = vector.shape_cast %65 : vector<1x1x32xf32> to vector<1x32xf32>
    %67 = vector.shape_cast %64 : vector<1x32xf32> to vector<1x1x32xf32>
    tpu.vector_store %arg13[%c2_40, %c1_41, %c0_42], %67 {strides = array<i32>} : memref<5x8x32xf32, #tpu.memory_space<vmem>>, vector<1x1x32xf32>,
    %68 = arith.index_cast %43 : i32 to index
    %c3_43 = arith.constant 3 : index
    %69 = memref.load %arg1[%68, %c3_43] : memref<16x5xi32, #tpu.memory_space<smem>>
    %c16_i32_44 = arith.constant 16 : i32
    %70 = arith.addi %c16_i32_44, %69 : i32
    %71 = arith.index_cast %70 : i32 to index
    %c0_45 = arith.constant 0 : index
    %72 = vector.load %arg2[%71, %c0_45] : memref<128x32xf32, #tpu.memory_space<vmem>>, vector<1x32xf32>
    %c3_46 = arith.constant 3 : index
    %c1_47 = arith.constant 1 : index
    %c0_48 = arith.constant 0 : index
    %73 = vector.load %arg13[%c3_46, %c1_47, %c0_48] : memref<5x8x32xf32, #tpu.memory_space<vmem>>, vector<1x1x32xf32>
    %74 = vector.shape_cast %73 : vector<1x1x32xf32> to vector<1x32xf32>
    %75 = vector.shape_cast %72 : vector<1x32xf32> to vector<1x1x32xf32>
    tpu.vector_store %arg13[%c3_46, %c1_47, %c0_48], %75 {strides = array<i32>} : memref<5x8x32xf32, #tpu.memory_space<vmem>>, vector<1x1x32xf32>,
    %76 = arith.index_cast %43 : i32 to index
    %c4_49 = arith.constant 4 : index
    %77 = memref.load %arg1[%76, %c4_49] : memref<16x5xi32, #tpu.memory_space<smem>>
    %c16_i32_50 = arith.constant 16 : i32
    %78 = arith.addi %c16_i32_50, %77 : i32
    %79 = arith.index_cast %78 : i32 to index
    %c0_51 = arith.constant 0 : index
    %80 = vector.load %arg2[%79, %c0_51] : memref<128x32xf32, #tpu.memory_space<vmem>>, vector<1x32xf32>
    %c4_52 = arith.constant 4 : index
    %c1_53 = arith.constant 1 : index
    %c0_54 = arith.constant 0 : index
    %81 = vector.load %arg13[%c4_52, %c1_53, %c0_54] : memref<5x8x32xf32, #tpu.memory_space<vmem>>, vector<1x1x32xf32>
    %82 = vector.shape_cast %81 : vector<1x1x32xf32> to vector<1x32xf32>
    %83 = vector.shape_cast %80 : vector<1x32xf32> to vector<1x1x32xf32>
    tpu.vector_store %arg13[%c4_52, %c1_53, %c0_54], %83 {strides = array<i32>} : memref<5x8x32xf32, #tpu.memory_space<vmem>>, vector<1x1x32xf32>,
    %c8_i32_55 = arith.constant 8 : i32
    %84 = arith.muli %arg0, %c8_i32_55 : i32
    %c2_i32 = arith.constant 2 : i32
    %85 = arith.addi %84, %c2_i32 : i32
    %86 = arith.index_cast %85 : i32 to index
    %c0_56 = arith.constant 0 : index
    %87 = memref.load %arg1[%86, %c0_56] : memref<16x5xi32, #tpu.memory_space<smem>>
    %c32_i32 = arith.constant 32 : i32
    %88 = arith.addi %c32_i32, %87 : i32
    %89 = arith.index_cast %88 : i32 to index
    %c0_57 = arith.constant 0 : index
    %90 = vector.load %arg2[%89, %c0_57] : memref<128x32xf32, #tpu.memory_space<vmem>>, vector<1x32xf32>
    %c0_58 = arith.constant 0 : index
    %c2_59 = arith.constant 2 : index
    %c0_60 = arith.constant 0 : index
    %91 = vector.load %arg13[%c0_58, %c2_59, %c0_60] : memref<5x8x32xf32, #tpu.memory_space<vmem>>, vector<1x1x32xf32>
    %92 = vector.shape_cast %91 : vector<1x1x32xf32> to vector<1x32xf32>
    %93 = vector.shape_cast %90 : vector<1x32xf32> to vector<1x1x32xf32>
    tpu.vector_store %arg13[%c0_58, %c2_59, %c0_60], %93 {strides = array<i32>} : memref<5x8x32xf32, #tpu.memory_space<vmem>>, vector<1x1x32xf32>,
    %94 = arith.index_cast %85 : i32 to index
    %c1_61 = arith.constant 1 : index
    %95 = memref.load %arg1[%94, %c1_61] : memref<16x5xi32, #tpu.memory_space<smem>>
    %c32_i32_62 = arith.constant 32 : i32
    %96 = arith.addi %c32_i32_62, %95 : i32
    %97 = arith.index_cast %96 : i32 to index
    %c0_63 = arith.constant 0 : index
    %98 = vector.load %arg2[%97, %c0_63] : memref<128x32xf32, #tpu.memory_space<vmem>>, vector<1x32xf32>
    %c1_64 = arith.constant 1 : index
    %c2_65 = arith.constant 2 : index
    %c0_66 = arith.constant 0 : index
    %99 = vector.load %arg13[%c1_64, %c2_65, %c0_66] : memref<5x8x32xf32, #tpu.memory_space<vmem>>, vector<1x1x32xf32>
    %100 = vector.shape_cast %99 : vector<1x1x32xf32> to vector<1x32xf32>
    %101 = vector.shape_cast %98 : vector<1x32xf32> to vector<1x1x32xf32>
    tpu.vector_store %arg13[%c1_64, %c2_65, %c0_66], %101 {strides = array<i32>} : memref<5x8x32xf32, #tpu.memory_space<vmem>>, vector<1x1x32xf32>,
    %102 = arith.index_cast %85 : i32 to index
    %c2_67 = arith.constant 2 : index
    %103 = memref.load %arg1[%102, %c2_67] : memref<16x5xi32, #tpu.memory_space<smem>>
    %c32_i32_68 = arith.constant 32 : i32
    %104 = arith.addi %c32_i32_68, %103 : i32
    %105 = arith.index_cast %104 : i32 to index
    %c0_69 = arith.constant 0 : index
    %106 = vector.load %arg2[%105, %c0_69] : memref<128x32xf32, #tpu.memory_space<vmem>>, vector<1x32xf32>
    %c2_70 = arith.constant 2 : index
    %c2_71 = arith.constant 2 : index
    %c0_72 = arith.constant 0 : index
    %107 = vector.load %arg13[%c2_70, %c2_71, %c0_72] : memref<5x8x32xf32, #tpu.memory_space<vmem>>, vector<1x1x32xf32>
    %108 = vector.shape_cast %107 : vector<1x1x32xf32> to vector<1x32xf32>
    %109 = vector.shape_cast %106 : vector<1x32xf32> to vector<1x1x32xf32>
    tpu.vector_store %arg13[%c2_70, %c2_71, %c0_72], %109 {strides = array<i32>} : memref<5x8x32xf32, #tpu.memory_space<vmem>>, vector<1x1x32xf32>,
    %110 = arith.index_cast %85 : i32 to index
    %c3_73 = arith.constant 3 : index
    %111 = memref.load %arg1[%110, %c3_73] : memref<16x5xi32, #tpu.memory_space<smem>>
    %c32_i32_74 = arith.constant 32 : i32
    %112 = arith.addi %c32_i32_74, %111 : i32
    %113 = arith.index_cast %112 : i32 to index
    %c0_75 = arith.constant 0 : index
    %114 = vector.load %arg2[%113, %c0_75] : memref<128x32xf32, #tpu.memory_space<vmem>>, vector<1x32xf32>
    %c3_76 = arith.constant 3 : index
    %c2_77 = arith.constant 2 : index
    %c0_78 = arith.constant 0 : index
    %115 = vector.load %arg13[%c3_76, %c2_77, %c0_78] : memref<5x8x32xf32, #tpu.memory_space<vmem>>, vector<1x1x32xf32>
    %116 = vector.shape_cast %115 : vector<1x1x32xf32> to vector<1x32xf32>
    %117 = vector.shape_cast %114 : vector<1x32xf32> to vector<1x1x32xf32>
    tpu.vector_store %arg13[%c3_76, %c2_77, %c0_78], %117 {strides = array<i32>} : memref<5x8x32xf32, #tpu.memory_space<vmem>>, vector<1x1x32xf32>,
    %118 = arith.index_cast %85 : i32 to index
    %c4_79 = arith.constant 4 : index
    %119 = memref.load %arg1[%118, %c4_79] : memref<16x5xi32, #tpu.memory_space<smem>>
    %c32_i32_80 = arith.constant 32 : i32
    %120 = arith.addi %c32_i32_80, %119 : i32
    %121 = arith.index_cast %120 : i32 to index
    %c0_81 = arith.constant 0 : index
    %122 = vector.load %arg2[%121, %c0_81] : memref<128x32xf32, #tpu.memory_space<vmem>>, vector<1x32xf32>
    %c4_82 = arith.constant 4 : index
    %c2_83 = arith.constant 2 : index
    %c0_84 = arith.constant 0 : index
    %123 = vector.load %arg13[%c4_82, %c2_83, %c0_84] : memref<5x8x32xf32, #tpu.memory_space<vmem>>, vector<1x1x32xf32>
    %124 = vector.shape_cast %123 : vector<1x1x32xf32> to vector<1x32xf32>
    %125 = vector.shape_cast %122 : vector<1x32xf32> to vector<1x1x32xf32>
    tpu.vector_store %arg13[%c4_82, %c2_83, %c0_84], %125 {strides = array<i32>} : memref<5x8x32xf32, #tpu.memory_space<vmem>>, vector<1x1x32xf32>,
    %c8_i32_85 = arith.constant 8 : i32
    %126 = arith.muli %arg0, %c8_i32_85 : i32
    %c3_i32 = arith.constant 3 : i32
    %127 = arith.addi %126, %c3_i32 : i32
    %128 = arith.index_cast %127 : i32 to index
    %c0_86 = arith.constant 0 : index
    %129 = memref.load %arg1[%128, %c0_86] : memref<16x5xi32, #tpu.memory_space<smem>>
    %c48_i32 = arith.constant 48 : i32
    %130 = arith.addi %c48_i32, %129 : i32
    %131 = arith.index_cast %130 : i32 to index
    %c0_87 = arith.constant 0 : index
    %132 = vector.load %arg2[%131, %c0_87] : memref<128x32xf32, #tpu.memory_space<vmem>>, vector<1x32xf32>
    %c0_88 = arith.constant 0 : index
    %c3_89 = arith.constant 3 : index
    %c0_90 = arith.constant 0 : index
    %133 = vector.load %arg13[%c0_88, %c3_89, %c0_90] : memref<5x8x32xf32, #tpu.memory_space<vmem>>, vector<1x1x32xf32>
    %134 = vector.shape_cast %133 : vector<1x1x32xf32> to vector<1x32xf32>
    %135 = vector.shape_cast %132 : vector<1x32xf32> to vector<1x1x32xf32>
    tpu.vector_store %arg13[%c0_88, %c3_89, %c0_90], %135 {strides = array<i32>} : memref<5x8x32xf32, #tpu.memory_space<vmem>>, vector<1x1x32xf32>,
    %136 = arith.index_cast %127 : i32 to index
    %c1_91 = arith.constant 1 : index
    %137 = memref.load %arg1[%136, %c1_91] : memref<16x5xi32, #tpu.memory_space<smem>>
    %c48_i32_92 = arith.constant 48 : i32
    %138 = arith.addi %c48_i32_92, %137 : i32
    %139 = arith.index_cast %138 : i32 to index
    %c0_93 = arith.constant 0 : index
    %140 = vector.load %arg2[%139, %c0_93] : memref<128x32xf32, #tpu.memory_space<vmem>>, vector<1x32xf32>
    %c1_94 = arith.constant 1 : index
    %c3_95 = arith.constant 3 : index
    %c0_96 = arith.constant 0 : index
    %141 = vector.load %arg13[%c1_94, %c3_95, %c0_96] : memref<5x8x32xf32, #tpu.memory_space<vmem>>, vector<1x1x32xf32>
    %142 = vector.shape_cast %141 : vector<1x1x32xf32> to vector<1x32xf32>
    %143 = vector.shape_cast %140 : vector<1x32xf32> to vector<1x1x32xf32>
    tpu.vector_store %arg13[%c1_94, %c3_95, %c0_96], %143 {strides = array<i32>} : memref<5x8x32xf32, #tpu.memory_space<vmem>>, vector<1x1x32xf32>,
    %144 = arith.index_cast %127 : i32 to index
    %c2_97 = arith.constant 2 : index
    %145 = memref.load %arg1[%144, %c2_97] : memref<16x5xi32, #tpu.memory_space<smem>>
    %c48_i32_98 = arith.constant 48 : i32
    %146 = arith.addi %c48_i32_98, %145 : i32
    %147 = arith.index_cast %146 : i32 to index
    %c0_99 = arith.constant 0 : index
    %148 = vector.load %arg2[%147, %c0_99] : memref<128x32xf32, #tpu.memory_space<vmem>>, vector<1x32xf32>
    %c2_100 = arith.constant 2 : index
    %c3_101 = arith.constant 3 : index
    %c0_102 = arith.constant 0 : index
    %149 = vector.load %arg13[%c2_100, %c3_101, %c0_102] : memref<5x8x32xf32, #tpu.memory_space<vmem>>, vector<1x1x32xf32>
    %150 = vector.shape_cast %149 : vector<1x1x32xf32> to vector<1x32xf32>
    %151 = vector.shape_cast %148 : vector<1x32xf32> to vector<1x1x32xf32>
    tpu.vector_store %arg13[%c2_100, %c3_101, %c0_102], %151 {strides = array<i32>} : memref<5x8x32xf32, #tpu.memory_space<vmem>>, vector<1x1x32xf32>,
    %152 = arith.index_cast %127 : i32 to index
    %c3_103 = arith.constant 3 : index
    %153 = memref.load %arg1[%152, %c3_103] : memref<16x5xi32, #tpu.memory_space<smem>>
    %c48_i32_104 = arith.constant 48 : i32
    %154 = arith.addi %c48_i32_104, %153 : i32
    %155 = arith.index_cast %154 : i32 to index
    %c0_105 = arith.constant 0 : index
    %156 = vector.load %arg2[%155, %c0_105] : memref<128x32xf32, #tpu.memory_space<vmem>>, vector<1x32xf32>
    %c3_106 = arith.constant 3 : index
    %c3_107 = arith.constant 3 : index
    %c0_108 = arith.constant 0 : index
    %157 = vector.load %arg13[%c3_106, %c3_107, %c0_108] : memref<5x8x32xf32, #tpu.memory_space<vmem>>, vector<1x1x32xf32>
    %158 = vector.shape_cast %157 : vector<1x1x32xf32> to vector<1x32xf32>
    %159 = vector.shape_cast %156 : vector<1x32xf32> to vector<1x1x32xf32>
    tpu.vector_store %arg13[%c3_106, %c3_107, %c0_108], %159 {strides = array<i32>} : memref<5x8x32xf32, #tpu.memory_space<vmem>>, vector<1x1x32xf32>,
    %160 = arith.index_cast %127 : i32 to index
    %c4_109 = arith.constant 4 : index
    %161 = memref.load %arg1[%160, %c4_109] : memref<16x5xi32, #tpu.memory_space<smem>>
    %c48_i32_110 = arith.constant 48 : i32
    %162 = arith.addi %c48_i32_110, %161 : i32
    %163 = arith.index_cast %162 : i32 to index
    %c0_111 = arith.constant 0 : index
    %164 = vector.load %arg2[%163, %c0_111] : memref<128x32xf32, #tpu.memory_space<vmem>>, vector<1x32xf32>
    %c4_112 = arith.constant 4 : index
    %c3_113 = arith.constant 3 : index
    %c0_114 = arith.constant 0 : index
    %165 = vector.load %arg13[%c4_112, %c3_113, %c0_114] : memref<5x8x32xf32, #tpu.memory_space<vmem>>, vector<1x1x32xf32>
    %166 = vector.shape_cast %165 : vector<1x1x32xf32> to vector<1x32xf32>
    %167 = vector.shape_cast %164 : vector<1x32xf32> to vector<1x1x32xf32>
    tpu.vector_store %arg13[%c4_112, %c3_113, %c0_114], %167 {strides = array<i32>} : memref<5x8x32xf32, #tpu.memory_space<vmem>>, vector<1x1x32xf32>,
    %c8_i32_115 = arith.constant 8 : i32
    %168 = arith.muli %arg0, %c8_i32_115 : i32
    %c4_i32 = arith.constant 4 : i32
    %169 = arith.addi %168, %c4_i32 : i32
    %170 = arith.index_cast %169 : i32 to index
    %c0_116 = arith.constant 0 : index
    %171 = memref.load %arg1[%170, %c0_116] : memref<16x5xi32, #tpu.memory_space<smem>>
    %c64_i32 = arith.constant 64 : i32
    %172 = arith.addi %c64_i32, %171 : i32
    %173 = arith.index_cast %172 : i32 to index
    %c0_117 = arith.constant 0 : index
    %174 = vector.load %arg2[%173, %c0_117] : memref<128x32xf32, #tpu.memory_space<vmem>>, vector<1x32xf32>
    %c0_118 = arith.constant 0 : index
    %c4_119 = arith.constant 4 : index
    %c0_120 = arith.constant 0 : index
    %175 = vector.load %arg13[%c0_118, %c4_119, %c0_120] : memref<5x8x32xf32, #tpu.memory_space<vmem>>, vector<1x1x32xf32>
    %176 = vector.shape_cast %175 : vector<1x1x32xf32> to vector<1x32xf32>
    %177 = vector.shape_cast %174 : vector<1x32xf32> to vector<1x1x32xf32>
    tpu.vector_store %arg13[%c0_118, %c4_119, %c0_120], %177 {strides = array<i32>} : memref<5x8x32xf32, #tpu.memory_space<vmem>>, vector<1x1x32xf32>,
    %178 = arith.index_cast %169 : i32 to index
    %c1_121 = arith.constant 1 : index
    %179 = memref.load %arg1[%178, %c1_121] : memref<16x5xi32, #tpu.memory_space<smem>>
    %c64_i32_122 = arith.constant 64 : i32
    %180 = arith.addi %c64_i32_122, %179 : i32
    %181 = arith.index_cast %180 : i32 to index
    %c0_123 = arith.constant 0 : index
    %182 = vector.load %arg2[%181, %c0_123] : memref<128x32xf32, #tpu.memory_space<vmem>>, vector<1x32xf32>
    %c1_124 = arith.constant 1 : index
    %c4_125 = arith.constant 4 : index
    %c0_126 = arith.constant 0 : index
    %183 = vector.load %arg13[%c1_124, %c4_125, %c0_126] : memref<5x8x32xf32, #tpu.memory_space<vmem>>, vector<1x1x32xf32>
    %184 = vector.shape_cast %183 : vector<1x1x32xf32> to vector<1x32xf32>
    %185 = vector.shape_cast %182 : vector<1x32xf32> to vector<1x1x32xf32>
    tpu.vector_store %arg13[%c1_124, %c4_125, %c0_126], %185 {strides = array<i32>} : memref<5x8x32xf32, #tpu.memory_space<vmem>>, vector<1x1x32xf32>,
    %186 = arith.index_cast %169 : i32 to index
    %c2_127 = arith.constant 2 : index
    %187 = memref.load %arg1[%186, %c2_127] : memref<16x5xi32, #tpu.memory_space<smem>>
    %c64_i32_128 = arith.constant 64 : i32
    %188 = arith.addi %c64_i32_128, %187 : i32
    %189 = arith.index_cast %188 : i32 to index
    %c0_129 = arith.constant 0 : index
    %190 = vector.load %arg2[%189, %c0_129] : memref<128x32xf32, #tpu.memory_space<vmem>>, vector<1x32xf32>
    %c2_130 = arith.constant 2 : index
    %c4_131 = arith.constant 4 : index
    %c0_132 = arith.constant 0 : index
    %191 = vector.load %arg13[%c2_130, %c4_131, %c0_132] : memref<5x8x32xf32, #tpu.memory_space<vmem>>, vector<1x1x32xf32>
    %192 = vector.shape_cast %191 : vector<1x1x32xf32> to vector<1x32xf32>
    %193 = vector.shape_cast %190 : vector<1x32xf32> to vector<1x1x32xf32>
    tpu.vector_store %arg13[%c2_130, %c4_131, %c0_132], %193 {strides = array<i32>} : memref<5x8x32xf32, #tpu.memory_space<vmem>>, vector<1x1x32xf32>,
    %194 = arith.index_cast %169 : i32 to index
    %c3_133 = arith.constant 3 : index
    %195 = memref.load %arg1[%194, %c3_133] : memref<16x5xi32, #tpu.memory_space<smem>>
    %c64_i32_134 = arith.constant 64 : i32
    %196 = arith.addi %c64_i32_134, %195 : i32
    %197 = arith.index_cast %196 : i32 to index
    %c0_135 = arith.constant 0 : index
    %198 = vector.load %arg2[%197, %c0_135] : memref<128x32xf32, #tpu.memory_space<vmem>>, vector<1x32xf32>
    %c3_136 = arith.constant 3 : index
    %c4_137 = arith.constant 4 : index
    %c0_138 = arith.constant 0 : index
    %199 = vector.load %arg13[%c3_136, %c4_137, %c0_138] : memref<5x8x32xf32, #tpu.memory_space<vmem>>, vector<1x1x32xf32>
    %200 = vector.shape_cast %199 : vector<1x1x32xf32> to vector<1x32xf32>
    %201 = vector.shape_cast %198 : vector<1x32xf32> to vector<1x1x32xf32>
    tpu.vector_store %arg13[%c3_136, %c4_137, %c0_138], %201 {strides = array<i32>} : memref<5x8x32xf32, #tpu.memory_space<vmem>>, vector<1x1x32xf32>,
    %202 = arith.index_cast %169 : i32 to index
    %c4_139 = arith.constant 4 : index
    %203 = memref.load %arg1[%202, %c4_139] : memref<16x5xi32, #tpu.memory_space<smem>>
    %c64_i32_140 = arith.constant 64 : i32
    %204 = arith.addi %c64_i32_140, %203 : i32
    %205 = arith.index_cast %204 : i32 to index
    %c0_141 = arith.constant 0 : index
    %206 = vector.load %arg2[%205, %c0_141] : memref<128x32xf32, #tpu.memory_space<vmem>>, vector<1x32xf32>
    %c4_142 = arith.constant 4 : index
    %c4_143 = arith.constant 4 : index
    %c0_144 = arith.constant 0 : index
    %207 = vector.load %arg13[%c4_142, %c4_143, %c0_144] : memref<5x8x32xf32, #tpu.memory_space<vmem>>, vector<1x1x32xf32>
    %208 = vector.shape_cast %207 : vector<1x1x32xf32> to vector<1x32xf32>
    %209 = vector.shape_cast %206 : vector<1x32xf32> to vector<1x1x32xf32>
    tpu.vector_store %arg13[%c4_142, %c4_143, %c0_144], %209 {strides = array<i32>} : memref<5x8x32xf32, #tpu.memory_space<vmem>>, vector<1x1x32xf32>,
    %c8_i32_145 = arith.constant 8 : i32
    %210 = arith.muli %arg0, %c8_i32_145 : i32
    %c5_i32 = arith.constant 5 : i32
    %211 = arith.addi %210, %c5_i32 : i32
    %212 = arith.index_cast %211 : i32 to index
    %c0_146 = arith.constant 0 : index
    %213 = memref.load %arg1[%212, %c0_146] : memref<16x5xi32, #tpu.memory_space<smem>>
    %c80_i32 = arith.constant 80 : i32
    %214 = arith.addi %c80_i32, %213 : i32
    %215 = arith.index_cast %214 : i32 to index
    %c0_147 = arith.constant 0 : index
    %216 = vector.load %arg2[%215, %c0_147] : memref<128x32xf32, #tpu.memory_space<vmem>>, vector<1x32xf32>
    %c0_148 = arith.constant 0 : index
    %c5 = arith.constant 5 : index
    %c0_149 = arith.constant 0 : index
    %217 = vector.load %arg13[%c0_148, %c5, %c0_149] : memref<5x8x32xf32, #tpu.memory_space<vmem>>, vector<1x1x32xf32>
    %218 = vector.shape_cast %217 : vector<1x1x32xf32> to vector<1x32xf32>
    %219 = vector.shape_cast %216 : vector<1x32xf32> to vector<1x1x32xf32>
    tpu.vector_store %arg13[%c0_148, %c5, %c0_149], %219 {strides = array<i32>} : memref<5x8x32xf32, #tpu.memory_space<vmem>>, vector<1x1x32xf32>,
    %220 = arith.index_cast %211 : i32 to index
    %c1_150 = arith.constant 1 : index
    %221 = memref.load %arg1[%220, %c1_150] : memref<16x5xi32, #tpu.memory_space<smem>>
    %c80_i32_151 = arith.constant 80 : i32
    %222 = arith.addi %c80_i32_151, %221 : i32
    %223 = arith.index_cast %222 : i32 to index
    %c0_152 = arith.constant 0 : index
    %224 = vector.load %arg2[%223, %c0_152] : memref<128x32xf32, #tpu.memory_space<vmem>>, vector<1x32xf32>
    %c1_153 = arith.constant 1 : index
    %c5_154 = arith.constant 5 : index
    %c0_155 = arith.constant 0 : index
    %225 = vector.load %arg13[%c1_153, %c5_154, %c0_155] : memref<5x8x32xf32, #tpu.memory_space<vmem>>, vector<1x1x32xf32>
    %226 = vector.shape_cast %225 : vector<1x1x32xf32> to vector<1x32xf32>
    %227 = vector.shape_cast %224 : vector<1x32xf32> to vector<1x1x32xf32>
    tpu.vector_store %arg13[%c1_153, %c5_154, %c0_155], %227 {strides = array<i32>} : memref<5x8x32xf32, #tpu.memory_space<vmem>>, vector<1x1x32xf32>,
    %228 = arith.index_cast %211 : i32 to index
    %c2_156 = arith.constant 2 : index
    %229 = memref.load %arg1[%228, %c2_156] : memref<16x5xi32, #tpu.memory_space<smem>>
    %c80_i32_157 = arith.constant 80 : i32
    %230 = arith.addi %c80_i32_157, %229 : i32
    %231 = arith.index_cast %230 : i32 to index
    %c0_158 = arith.constant 0 : index
    %232 = vector.load %arg2[%231, %c0_158] : memref<128x32xf32, #tpu.memory_space<vmem>>, vector<1x32xf32>
    %c2_159 = arith.constant 2 : index
    %c5_160 = arith.constant 5 : index
    %c0_161 = arith.constant 0 : index
    %233 = vector.load %arg13[%c2_159, %c5_160, %c0_161] : memref<5x8x32xf32, #tpu.memory_space<vmem>>, vector<1x1x32xf32>
    %234 = vector.shape_cast %233 : vector<1x1x32xf32> to vector<1x32xf32>
    %235 = vector.shape_cast %232 : vector<1x32xf32> to vector<1x1x32xf32>
    tpu.vector_store %arg13[%c2_159, %c5_160, %c0_161], %235 {strides = array<i32>} : memref<5x8x32xf32, #tpu.memory_space<vmem>>, vector<1x1x32xf32>,
    %236 = arith.index_cast %211 : i32 to index
    %c3_162 = arith.constant 3 : index
    %237 = memref.load %arg1[%236, %c3_162] : memref<16x5xi32, #tpu.memory_space<smem>>
    %c80_i32_163 = arith.constant 80 : i32
    %238 = arith.addi %c80_i32_163, %237 : i32
    %239 = arith.index_cast %238 : i32 to index
    %c0_164 = arith.constant 0 : index
    %240 = vector.load %arg2[%239, %c0_164] : memref<128x32xf32, #tpu.memory_space<vmem>>, vector<1x32xf32>
    %c3_165 = arith.constant 3 : index
    %c5_166 = arith.constant 5 : index
    %c0_167 = arith.constant 0 : index
    %241 = vector.load %arg13[%c3_165, %c5_166, %c0_167] : memref<5x8x32xf32, #tpu.memory_space<vmem>>, vector<1x1x32xf32>
    %242 = vector.shape_cast %241 : vector<1x1x32xf32> to vector<1x32xf32>
    %243 = vector.shape_cast %240 : vector<1x32xf32> to vector<1x1x32xf32>
    tpu.vector_store %arg13[%c3_165, %c5_166, %c0_167], %243 {strides = array<i32>} : memref<5x8x32xf32, #tpu.memory_space<vmem>>, vector<1x1x32xf32>,
    %244 = arith.index_cast %211 : i32 to index
    %c4_168 = arith.constant 4 : index
    %245 = memref.load %arg1[%244, %c4_168] : memref<16x5xi32, #tpu.memory_space<smem>>
    %c80_i32_169 = arith.constant 80 : i32
    %246 = arith.addi %c80_i32_169, %245 : i32
    %247 = arith.index_cast %246 : i32 to index
    %c0_170 = arith.constant 0 : index
    %248 = vector.load %arg2[%247, %c0_170] : memref<128x32xf32, #tpu.memory_space<vmem>>, vector<1x32xf32>
    %c4_171 = arith.constant 4 : index
    %c5_172 = arith.constant 5 : index
    %c0_173 = arith.constant 0 : index
    %249 = vector.load %arg13[%c4_171, %c5_172, %c0_173] : memref<5x8x32xf32, #tpu.memory_space<vmem>>, vector<1x1x32xf32>
    %250 = vector.shape_cast %249 : vector<1x1x32xf32> to vector<1x32xf32>
    %251 = vector.shape_cast %248 : vector<1x32xf32> to vector<1x1x32xf32>
    tpu.vector_store %arg13[%c4_171, %c5_172, %c0_173], %251 {strides = array<i32>} : memref<5x8x32xf32, #tpu.memory_space<vmem>>, vector<1x1x32xf32>,
    %c8_i32_174 = arith.constant 8 : i32
    %252 = arith.muli %arg0, %c8_i32_174 : i32
    %c6_i32 = arith.constant 6 : i32
    %253 = arith.addi %252, %c6_i32 : i32
    %254 = arith.index_cast %253 : i32 to index
    %c0_175 = arith.constant 0 : index
    %255 = memref.load %arg1[%254, %c0_175] : memref<16x5xi32, #tpu.memory_space<smem>>
    %c96_i32 = arith.constant 96 : i32
    %256 = arith.addi %c96_i32, %255 : i32
    %257 = arith.index_cast %256 : i32 to index
    %c0_176 = arith.constant 0 : index
    %258 = vector.load %arg2[%257, %c0_176] : memref<128x32xf32, #tpu.memory_space<vmem>>, vector<1x32xf32>
    %c0_177 = arith.constant 0 : index
    %c6 = arith.constant 6 : index
    %c0_178 = arith.constant 0 : index
    %259 = vector.load %arg13[%c0_177, %c6, %c0_178] : memref<5x8x32xf32, #tpu.memory_space<vmem>>, vector<1x1x32xf32>
    %260 = vector.shape_cast %259 : vector<1x1x32xf32> to vector<1x32xf32>
    %261 = vector.shape_cast %258 : vector<1x32xf32> to vector<1x1x32xf32>
    tpu.vector_store %arg13[%c0_177, %c6, %c0_178], %261 {strides = array<i32>} : memref<5x8x32xf32, #tpu.memory_space<vmem>>, vector<1x1x32xf32>,
    %262 = arith.index_cast %253 : i32 to index
    %c1_179 = arith.constant 1 : index
    %263 = memref.load %arg1[%262, %c1_179] : memref<16x5xi32, #tpu.memory_space<smem>>
    %c96_i32_180 = arith.constant 96 : i32
    %264 = arith.addi %c96_i32_180, %263 : i32
    %265 = arith.index_cast %264 : i32 to index
    %c0_181 = arith.constant 0 : index
    %266 = vector.load %arg2[%265, %c0_181] : memref<128x32xf32, #tpu.memory_space<vmem>>, vector<1x32xf32>
    %c1_182 = arith.constant 1 : index
    %c6_183 = arith.constant 6 : index
    %c0_184 = arith.constant 0 : index
    %267 = vector.load %arg13[%c1_182, %c6_183, %c0_184] : memref<5x8x32xf32, #tpu.memory_space<vmem>>, vector<1x1x32xf32>
    %268 = vector.shape_cast %267 : vector<1x1x32xf32> to vector<1x32xf32>
    %269 = vector.shape_cast %266 : vector<1x32xf32> to vector<1x1x32xf32>
    tpu.vector_store %arg13[%c1_182, %c6_183, %c0_184], %269 {strides = array<i32>} : memref<5x8x32xf32, #tpu.memory_space<vmem>>, vector<1x1x32xf32>,
    %270 = arith.index_cast %253 : i32 to index
    %c2_185 = arith.constant 2 : index
    %271 = memref.load %arg1[%270, %c2_185] : memref<16x5xi32, #tpu.memory_space<smem>>
    %c96_i32_186 = arith.constant 96 : i32
    %272 = arith.addi %c96_i32_186, %271 : i32
    %273 = arith.index_cast %272 : i32 to index
    %c0_187 = arith.constant 0 : index
    %274 = vector.load %arg2[%273, %c0_187] : memref<128x32xf32, #tpu.memory_space<vmem>>, vector<1x32xf32>
    %c2_188 = arith.constant 2 : index
    %c6_189 = arith.constant 6 : index
    %c0_190 = arith.constant 0 : index
    %275 = vector.load %arg13[%c2_188, %c6_189, %c0_190] : memref<5x8x32xf32, #tpu.memory_space<vmem>>, vector<1x1x32xf32>
    %276 = vector.shape_cast %275 : vector<1x1x32xf32> to vector<1x32xf32>
    %277 = vector.shape_cast %274 : vector<1x32xf32> to vector<1x1x32xf32>
    tpu.vector_store %arg13[%c2_188, %c6_189, %c0_190], %277 {strides = array<i32>} : memref<5x8x32xf32, #tpu.memory_space<vmem>>, vector<1x1x32xf32>,
    %278 = arith.index_cast %253 : i32 to index
    %c3_191 = arith.constant 3 : index
    %279 = memref.load %arg1[%278, %c3_191] : memref<16x5xi32, #tpu.memory_space<smem>>
    %c96_i32_192 = arith.constant 96 : i32
    %280 = arith.addi %c96_i32_192, %279 : i32
    %281 = arith.index_cast %280 : i32 to index
    %c0_193 = arith.constant 0 : index
    %282 = vector.load %arg2[%281, %c0_193] : memref<128x32xf32, #tpu.memory_space<vmem>>, vector<1x32xf32>
    %c3_194 = arith.constant 3 : index
    %c6_195 = arith.constant 6 : index
    %c0_196 = arith.constant 0 : index
    %283 = vector.load %arg13[%c3_194, %c6_195, %c0_196] : memref<5x8x32xf32, #tpu.memory_space<vmem>>, vector<1x1x32xf32>
    %284 = vector.shape_cast %283 : vector<1x1x32xf32> to vector<1x32xf32>
    %285 = vector.shape_cast %282 : vector<1x32xf32> to vector<1x1x32xf32>
    tpu.vector_store %arg13[%c3_194, %c6_195, %c0_196], %285 {strides = array<i32>} : memref<5x8x32xf32, #tpu.memory_space<vmem>>, vector<1x1x32xf32>,
    %286 = arith.index_cast %253 : i32 to index
    %c4_197 = arith.constant 4 : index
    %287 = memref.load %arg1[%286, %c4_197] : memref<16x5xi32, #tpu.memory_space<smem>>
    %c96_i32_198 = arith.constant 96 : i32
    %288 = arith.addi %c96_i32_198, %287 : i32
    %289 = arith.index_cast %288 : i32 to index
    %c0_199 = arith.constant 0 : index
    %290 = vector.load %arg2[%289, %c0_199] : memref<128x32xf32, #tpu.memory_space<vmem>>, vector<1x32xf32>
    %c4_200 = arith.constant 4 : index
    %c6_201 = arith.constant 6 : index
    %c0_202 = arith.constant 0 : index
    %291 = vector.load %arg13[%c4_200, %c6_201, %c0_202] : memref<5x8x32xf32, #tpu.memory_space<vmem>>, vector<1x1x32xf32>
    %292 = vector.shape_cast %291 : vector<1x1x32xf32> to vector<1x32xf32>
    %293 = vector.shape_cast %290 : vector<1x32xf32> to vector<1x1x32xf32>
    tpu.vector_store %arg13[%c4_200, %c6_201, %c0_202], %293 {strides = array<i32>} : memref<5x8x32xf32, #tpu.memory_space<vmem>>, vector<1x1x32xf32>,
    %c8_i32_203 = arith.constant 8 : i32
    %294 = arith.muli %arg0, %c8_i32_203 : i32
    %c7_i32 = arith.constant 7 : i32
    %295 = arith.addi %294, %c7_i32 : i32
    %296 = arith.index_cast %295 : i32 to index
    %c0_204 = arith.constant 0 : index
    %297 = memref.load %arg1[%296, %c0_204] : memref<16x5xi32, #tpu.memory_space<smem>>
    %c112_i32 = arith.constant 112 : i32
    %298 = arith.addi %c112_i32, %297 : i32
    %299 = arith.index_cast %298 : i32 to index
    %c0_205 = arith.constant 0 : index
    %300 = vector.load %arg2[%299, %c0_205] : memref<128x32xf32, #tpu.memory_space<vmem>>, vector<1x32xf32>
    %c0_206 = arith.constant 0 : index
    %c7 = arith.constant 7 : index
    %c0_207 = arith.constant 0 : index
    %301 = vector.load %arg13[%c0_206, %c7, %c0_207] : memref<5x8x32xf32, #tpu.memory_space<vmem>>, vector<1x1x32xf32>
    %302 = vector.shape_cast %301 : vector<1x1x32xf32> to vector<1x32xf32>
    %303 = vector.shape_cast %300 : vector<1x32xf32> to vector<1x1x32xf32>
    tpu.vector_store %arg13[%c0_206, %c7, %c0_207], %303 {strides = array<i32>} : memref<5x8x32xf32, #tpu.memory_space<vmem>>, vector<1x1x32xf32>,
    %304 = arith.index_cast %295 : i32 to index
    %c1_208 = arith.constant 1 : index
    %305 = memref.load %arg1[%304, %c1_208] : memref<16x5xi32, #tpu.memory_space<smem>>
    %c112_i32_209 = arith.constant 112 : i32
    %306 = arith.addi %c112_i32_209, %305 : i32
    %307 = arith.index_cast %306 : i32 to index
    %c0_210 = arith.constant 0 : index
    %308 = vector.load %arg2[%307, %c0_210] : memref<128x32xf32, #tpu.memory_space<vmem>>, vector<1x32xf32>
    %c1_211 = arith.constant 1 : index
    %c7_212 = arith.constant 7 : index
    %c0_213 = arith.constant 0 : index
    %309 = vector.load %arg13[%c1_211, %c7_212, %c0_213] : memref<5x8x32xf32, #tpu.memory_space<vmem>>, vector<1x1x32xf32>
    %310 = vector.shape_cast %309 : vector<1x1x32xf32> to vector<1x32xf32>
    %311 = vector.shape_cast %308 : vector<1x32xf32> to vector<1x1x32xf32>
    tpu.vector_store %arg13[%c1_211, %c7_212, %c0_213], %311 {strides = array<i32>} : memref<5x8x32xf32, #tpu.memory_space<vmem>>, vector<1x1x32xf32>,
    %312 = arith.index_cast %295 : i32 to index
    %c2_214 = arith.constant 2 : index
    %313 = memref.load %arg1[%312, %c2_214] : memref<16x5xi32, #tpu.memory_space<smem>>
    %c112_i32_215 = arith.constant 112 : i32
    %314 = arith.addi %c112_i32_215, %313 : i32
    %315 = arith.index_cast %314 : i32 to index
    %c0_216 = arith.constant 0 : index
    %316 = vector.load %arg2[%315, %c0_216] : memref<128x32xf32, #tpu.memory_space<vmem>>, vector<1x32xf32>
    %c2_217 = arith.constant 2 : index
    %c7_218 = arith.constant 7 : index
    %c0_219 = arith.constant 0 : index
    %317 = vector.load %arg13[%c2_217, %c7_218, %c0_219] : memref<5x8x32xf32, #tpu.memory_space<vmem>>, vector<1x1x32xf32>
    %318 = vector.shape_cast %317 : vector<1x1x32xf32> to vector<1x32xf32>
    %319 = vector.shape_cast %316 : vector<1x32xf32> to vector<1x1x32xf32>
    tpu.vector_store %arg13[%c2_217, %c7_218, %c0_219], %319 {strides = array<i32>} : memref<5x8x32xf32, #tpu.memory_space<vmem>>, vector<1x1x32xf32>,
    %320 = arith.index_cast %295 : i32 to index
    %c3_220 = arith.constant 3 : index
    %321 = memref.load %arg1[%320, %c3_220] : memref<16x5xi32, #tpu.memory_space<smem>>
    %c112_i32_221 = arith.constant 112 : i32
    %322 = arith.addi %c112_i32_221, %321 : i32
    %323 = arith.index_cast %322 : i32 to index
    %c0_222 = arith.constant 0 : index
    %324 = vector.load %arg2[%323, %c0_222] : memref<128x32xf32, #tpu.memory_space<vmem>>, vector<1x32xf32>
    %c3_223 = arith.constant 3 : index
    %c7_224 = arith.constant 7 : index
    %c0_225 = arith.constant 0 : index
    %325 = vector.load %arg13[%c3_223, %c7_224, %c0_225] : memref<5x8x32xf32, #tpu.memory_space<vmem>>, vector<1x1x32xf32>
    %326 = vector.shape_cast %325 : vector<1x1x32xf32> to vector<1x32xf32>
    %327 = vector.shape_cast %324 : vector<1x32xf32> to vector<1x1x32xf32>
    tpu.vector_store %arg13[%c3_223, %c7_224, %c0_225], %327 {strides = array<i32>} : memref<5x8x32xf32, #tpu.memory_space<vmem>>, vector<1x1x32xf32>,
    %328 = arith.index_cast %295 : i32 to index
    %c4_226 = arith.constant 4 : index
    %329 = memref.load %arg1[%328, %c4_226] : memref<16x5xi32, #tpu.memory_space<smem>>
    %c112_i32_227 = arith.constant 112 : i32
    %330 = arith.addi %c112_i32_227, %329 : i32
    %331 = arith.index_cast %330 : i32 to index
    %c0_228 = arith.constant 0 : index
    %332 = vector.load %arg2[%331, %c0_228] : memref<128x32xf32, #tpu.memory_space<vmem>>, vector<1x32xf32>
    %c4_229 = arith.constant 4 : index
    %c7_230 = arith.constant 7 : index
    %c0_231 = arith.constant 0 : index
    %333 = vector.load %arg13[%c4_229, %c7_230, %c0_231] : memref<5x8x32xf32, #tpu.memory_space<vmem>>, vector<1x1x32xf32>
    %334 = vector.shape_cast %333 : vector<1x1x32xf32> to vector<1x32xf32>
    %335 = vector.shape_cast %332 : vector<1x32xf32> to vector<1x1x32xf32>
    tpu.vector_store %arg13[%c4_229, %c7_230, %c0_231], %335 {strides = array<i32>} : memref<5x8x32xf32, #tpu.memory_space<vmem>>, vector<1x1x32xf32>,
    %c0_232 = arith.constant 0 : index
    %c0_233 = arith.constant 0 : index
    %c0_234 = arith.constant 0 : index
    %336 = vector.load %arg13[%c0_232, %c0_233, %c0_234] : memref<5x8x32xf32, #tpu.memory_space<vmem>>, vector<1x8x32xf32>
    %337 = vector.shape_cast %336 : vector<1x8x32xf32> to vector<8x32xf32>
    %c1_235 = arith.constant 1 : index
    %c0_236 = arith.constant 0 : index
    %c0_237 = arith.constant 0 : index
    %338 = vector.load %arg13[%c1_235, %c0_236, %c0_237] : memref<5x8x32xf32, #tpu.memory_space<vmem>>, vector<1x8x32xf32>
    %339 = vector.shape_cast %338 : vector<1x8x32xf32> to vector<8x32xf32>
    %c2_238 = arith.constant 2 : index
    %c0_239 = arith.constant 0 : index
    %c0_240 = arith.constant 0 : index
    %340 = vector.load %arg13[%c2_238, %c0_239, %c0_240] : memref<5x8x32xf32, #tpu.memory_space<vmem>>, vector<1x8x32xf32>
    %341 = vector.shape_cast %340 : vector<1x8x32xf32> to vector<8x32xf32>
    %c3_241 = arith.constant 3 : index
    %c0_242 = arith.constant 0 : index
    %c0_243 = arith.constant 0 : index
    %342 = vector.load %arg13[%c3_241, %c0_242, %c0_243] : memref<5x8x32xf32, #tpu.memory_space<vmem>>, vector<1x8x32xf32>
    %343 = vector.shape_cast %342 : vector<1x8x32xf32> to vector<8x32xf32>
    %c4_244 = arith.constant 4 : index
    %c0_245 = arith.constant 0 : index
    %c0_246 = arith.constant 0 : index
    %344 = vector.load %arg13[%c4_244, %c0_245, %c0_246] : memref<5x8x32xf32, #tpu.memory_space<vmem>>, vector<1x8x32xf32>
    %345 = vector.shape_cast %344 : vector<1x8x32xf32> to vector<8x32xf32>
    %cst = arith.constant 0.000000e+00 : f32
    %346 = vector.broadcast %cst : f32 to vector<8x32xf32>
    %c0_247 = arith.constant 0 : index
    %c224 = arith.constant 224 : index
    %347 = vector.load %arg14[%c0_247, %c224] : memref<8x256xf32, #tpu.memory_space<vmem>>, vector<8x32xf32>
    tpu.vector_store %arg14[%c0_247, %c224], %346 {strides = array<i32>} : memref<8x256xf32, #tpu.memory_space<vmem>>, vector<8x32xf32>,
    %348 = arith.mulf %337, %339 : vector<8x32xf32>
    %349 = arith.mulf %341, %343 : vector<8x32xf32>
    %c0_248 = arith.constant 0 : index
    %c0_249 = arith.constant 0 : index
    %350 = vector.load %arg14[%c0_248, %c0_249] : memref<8x256xf32, #tpu.memory_space<vmem>>, vector<8x32xf32>
    tpu.vector_store %arg14[%c0_248, %c0_249], %337 {strides = array<i32>} : memref<8x256xf32, #tpu.memory_space<vmem>>, vector<8x32xf32>,
    %c0_250 = arith.constant 0 : index
    %c32 = arith.constant 32 : index
    %351 = vector.load %arg14[%c0_250, %c32] : memref<8x256xf32, #tpu.memory_space<vmem>>, vector<8x32xf32>
    tpu.vector_store %arg14[%c0_250, %c32], %339 {strides = array<i32>} : memref<8x256xf32, #tpu.memory_space<vmem>>, vector<8x32xf32>,
    %c0_251 = arith.constant 0 : index
    %c64 = arith.constant 64 : index
    %352 = vector.load %arg14[%c0_251, %c64] : memref<8x256xf32, #tpu.memory_space<vmem>>, vector<8x32xf32>
    tpu.vector_store %arg14[%c0_251, %c64], %348 {strides = array<i32>} : memref<8x256xf32, #tpu.memory_space<vmem>>, vector<8x32xf32>,
    %c0_252 = arith.constant 0 : index
    %c96 = arith.constant 96 : index
    %353 = vector.load %arg14[%c0_252, %c96] : memref<8x256xf32, #tpu.memory_space<vmem>>, vector<8x32xf32>
    tpu.vector_store %arg14[%c0_252, %c96], %341 {strides = array<i32>} : memref<8x256xf32, #tpu.memory_space<vmem>>, vector<8x32xf32>,
    %c0_253 = arith.constant 0 : index
    %c128 = arith.constant 128 : index
    %354 = vector.load %arg14[%c0_253, %c128] : memref<8x256xf32, #tpu.memory_space<vmem>>, vector<8x32xf32>
    tpu.vector_store %arg14[%c0_253, %c128], %343 {strides = array<i32>} : memref<8x256xf32, #tpu.memory_space<vmem>>, vector<8x32xf32>,
    %c0_254 = arith.constant 0 : index
    %c160 = arith.constant 160 : index
    %355 = vector.load %arg14[%c0_254, %c160] : memref<8x256xf32, #tpu.memory_space<vmem>>, vector<8x32xf32>
    tpu.vector_store %arg14[%c0_254, %c160], %349 {strides = array<i32>} : memref<8x256xf32, #tpu.memory_space<vmem>>, vector<8x32xf32>,
    %c0_255 = arith.constant 0 : index
    %c192 = arith.constant 192 : index
    %356 = vector.load %arg14[%c0_255, %c192] : memref<8x256xf32, #tpu.memory_space<vmem>>, vector<8x32xf32>
    tpu.vector_store %arg14[%c0_255, %c192], %345 {strides = array<i32>} : memref<8x256xf32, #tpu.memory_space<vmem>>, vector<8x32xf32>,
    %c0_256 = arith.constant 0 : index
    %c0_257 = arith.constant 0 : index
    %357 = vector.load %arg14[%c0_256, %c0_257] : memref<8x256xf32, #tpu.memory_space<vmem>>, vector<8x256xf32>
    %c0_258 = arith.constant 0 : index
    %c0_259 = arith.constant 0 : index
    %358 = vector.load %arg3[%c0_258, %c0_259] : memref<1x256xf32, #tpu.memory_space<vmem>>, vector<1x256xf32>
    %359 = vector.broadcast %358 : vector<1x256xf32> to vector<8x256xf32>
    %360 = arith.mulf %357, %359 : vector<8x256xf32>
    %c0_260 = arith.constant 0 : index
    %c0_261 = arith.constant 0 : index
    %361 = vector.load %arg4[%c0_260, %c0_261] : memref<256x256xbf16, #tpu.memory_space<vmem>>, vector<256x256xbf16>
    %362 = arith.truncf %360 : vector<8x256xf32> to vector<8x256xbf16>
    %cst_262 = arith.constant dense<0.000000e+00> : vector<8x256xf32>
    %363 = tpu.matmul %362, %361, %cst_262 {dimension_numbers = #tpu.dot_dimension_numbers<[1], [0], [0], [1], [0, 0, 1, 1], [], []>} : vector<8x256xbf16>, vector<256x256xbf16>, vector<8x256xf32> -> vector<8x256xf32>
    %c0_263 = arith.constant 0 : index
    %c0_264 = arith.constant 0 : index
    %364 = vector.load %arg5[%c0_263, %c0_264] : memref<1x256xf32, #tpu.memory_space<vmem>>, vector<1x256xf32>
    %365 = vector.broadcast %364 : vector<1x256xf32> to vector<8x256xf32>
    %366 = arith.addf %363, %365 : vector<8x256xf32>
    %cst_265 = arith.constant 0.000000e+00 : f32
    %367 = vector.broadcast %cst_265 : f32 to vector<8x256xf32>
    %368 = arith.maximumf %366, %367 : vector<8x256xf32>
    %c0_266 = arith.constant 0 : index
    %c0_267 = arith.constant 0 : index
    %369 = vector.load %arg6[%c0_266, %c0_267] : memref<256x256xbf16, #tpu.memory_space<vmem>>, vector<256x256xbf16>
    %370 = arith.truncf %368 : vector<8x256xf32> to vector<8x256xbf16>
    %cst_268 = arith.constant dense<0.000000e+00> : vector<8x256xf32>
    %371 = tpu.matmul %370, %369, %cst_268 {dimension_numbers = #tpu.dot_dimension_numbers<[1], [0], [0], [1], [0, 0, 1, 1], [], []>} : vector<8x256xbf16>, vector<256x256xbf16>, vector<8x256xf32> -> vector<8x256xf32>
    %c0_269 = arith.constant 0 : index
    %c0_270 = arith.constant 0 : index
    %372 = vector.load %arg7[%c0_269, %c0_270] : memref<1x256xf32, #tpu.memory_space<vmem>>, vector<1x256xf32>
    %373 = vector.broadcast %372 : vector<1x256xf32> to vector<8x256xf32>
    %374 = arith.addf %371, %373 : vector<8x256xf32>
    %cst_271 = arith.constant 0.000000e+00 : f32
    %375 = vector.broadcast %cst_271 : f32 to vector<8x256xf32>
    %376 = arith.maximumf %374, %375 : vector<8x256xf32>
    %c0_272 = arith.constant 0 : index
    %c0_273 = arith.constant 0 : index
    %377 = vector.load %arg8[%c0_272, %c0_273] : memref<256x256xbf16, #tpu.memory_space<vmem>>, vector<256x256xbf16>
    %378 = arith.truncf %376 : vector<8x256xf32> to vector<8x256xbf16>
    %cst_274 = arith.constant dense<0.000000e+00> : vector<8x256xf32>
    %379 = tpu.matmul %378, %377, %cst_274 {dimension_numbers = #tpu.dot_dimension_numbers<[1], [0], [0], [1], [0, 0, 1, 1], [], []>} : vector<8x256xbf16>, vector<256x256xbf16>, vector<8x256xf32> -> vector<8x256xf32>
    %c0_275 = arith.constant 0 : index
    %c0_276 = arith.constant 0 : index
    %380 = vector.load %arg9[%c0_275, %c0_276] : memref<1x256xf32, #tpu.memory_space<vmem>>, vector<1x256xf32>
    %381 = vector.broadcast %380 : vector<1x256xf32> to vector<8x256xf32>
    %382 = arith.addf %379, %381 : vector<8x256xf32>
    %cst_277 = arith.constant 0.000000e+00 : f32
    %383 = vector.broadcast %cst_277 : f32 to vector<8x256xf32>
    %384 = arith.maximumf %382, %383 : vector<8x256xf32>
    %c0_278 = arith.constant 0 : index
    %c0_279 = arith.constant 0 : index
    %385 = vector.load %arg10[%c0_278, %c0_279] : memref<256x128xbf16, #tpu.memory_space<vmem>>, vector<256x128xbf16>
    %386 = arith.truncf %384 : vector<8x256xf32> to vector<8x256xbf16>
    %cst_280 = arith.constant dense<0.000000e+00> : vector<8x128xf32>
    %387 = tpu.matmul %386, %385, %cst_280 {dimension_numbers = #tpu.dot_dimension_numbers<[1], [0], [0], [1], [0, 0, 1, 1], [], []>} : vector<8x256xbf16>, vector<256x128xbf16>, vector<8x128xf32> -> vector<8x128xf32>
    %c0_281 = arith.constant 0 : index
    %c0_282 = arith.constant 0 : index
    %388 = vector.load %arg11[%c0_281, %c0_282] : memref<1x128xf32, #tpu.memory_space<vmem>>, vector<1x128xf32>
    %389 = vector.broadcast %388 : vector<1x128xf32> to vector<8x128xf32>
    %390 = arith.addf %387, %389 : vector<8x128xf32>
    %c0_283 = arith.constant 0 : index
    %c0_284 = arith.constant 0 : index
    %391 = vector.load %arg12[%c0_283, %c0_284] : memref<8x128xf32, #tpu.memory_space<vmem>>, vector<8x128xf32>
    tpu.vector_store %arg12[%c0_283, %c0_284], %390 {strides = array<i32>} : memref<8x128xf32, #tpu.memory_space<vmem>>, vector<8x128xf32>,
    return
  }
  func.func @transform_0(%arg0: i32, %arg1: memref<16x5xi32, #tpu.memory_space<smem>>) -> (i32, i32) {
    %c0_i32 = arith.constant 0 : i32
    %c0_i32_0 = arith.constant 0 : i32
    return %arg0, %c0_i32 : i32, i32
  }
  func.func @transform_1(%arg0: i32, %arg1: memref<16x5xi32, #tpu.memory_space<smem>>) -> (i32, i32) {
    %c0_i32 = arith.constant 0 : i32
    %c0_i32_0 = arith.constant 0 : i32
    %c0_i32_1 = arith.constant 0 : i32
    return %c0_i32, %c0_i32_0 : i32, i32
  }
  func.func @transform_2(%arg0: i32, %arg1: memref<16x5xi32, #tpu.memory_space<smem>>) -> (i32, i32) {
    %c0_i32 = arith.constant 0 : i32
    %c0_i32_0 = arith.constant 0 : i32
    %c0_i32_1 = arith.constant 0 : i32
    return %c0_i32, %c0_i32_0 : i32, i32
  }
  func.func @transform_3(%arg0: i32, %arg1: memref<16x5xi32, #tpu.memory_space<smem>>) -> (i32, i32) {
    %c0_i32 = arith.constant 0 : i32
    %c0_i32_0 = arith.constant 0 : i32
    %c0_i32_1 = arith.constant 0 : i32
    return %c0_i32, %c0_i32_0 : i32, i32
  }
  func.func @transform_4(%arg0: i32, %arg1: memref<16x5xi32, #tpu.memory_space<smem>>) -> (i32, i32) {
    %c0_i32 = arith.constant 0 : i32
    %c0_i32_0 = arith.constant 0 : i32
    %c0_i32_1 = arith.constant 0 : i32
    return %c0_i32, %c0_i32_0 : i32, i32
  }
  func.func @transform_5(%arg0: i32, %arg1: memref<16x5xi32, #tpu.memory_space<smem>>) -> (i32, i32) {
    %c0_i32 = arith.constant 0 : i32
    %c0_i32_0 = arith.constant 0 : i32
    %c0_i32_1 = arith.constant 0 : i32
    return %c0_i32, %c0_i32_0 : i32, i32
  }
  func.func @transform_6(%arg0: i32, %arg1: memref<16x5xi32, #tpu.memory_space<smem>>) -> (i32, i32) {
    %c0_i32 = arith.constant 0 : i32
    %c0_i32_0 = arith.constant 0 : i32
    %c0_i32_1 = arith.constant 0 : i32
    return %c0_i32, %c0_i32_0 : i32, i32
  }
  func.func @transform_7(%arg0: i32, %arg1: memref<16x5xi32, #tpu.memory_space<smem>>) -> (i32, i32) {
    %c0_i32 = arith.constant 0 : i32
    %c0_i32_0 = arith.constant 0 : i32
    %c0_i32_1 = arith.constant 0 : i32
    return %c0_i32, %c0_i32_0 : i32, i32
  }
  func.func @transform_8(%arg0: i32, %arg1: memref<16x5xi32, #tpu.memory_space<smem>>) -> (i32, i32) {
    %c0_i32 = arith.constant 0 : i32
    %c0_i32_0 = arith.constant 0 : i32
    %c0_i32_1 = arith.constant 0 : i32
    return %c0_i32, %c0_i32_0 : i32, i32
  }
  func.func @transform_9(%arg0: i32, %arg1: memref<16x5xi32, #tpu.memory_space<smem>>) -> (i32, i32) {
    %c0_i32 = arith.constant 0 : i32
    %c0_i32_0 = arith.constant 0 : i32
    %c0_i32_1 = arith.constant 0 : i32
    return %c0_i32, %c0_i32_0 : i32, i32
  }
  func.func @transform_10(%arg0: i32, %arg1: memref<16x5xi32, #tpu.memory_space<smem>>) -> (i32, i32) {
    %c0_i32 = arith.constant 0 : i32
    %c0_i32_0 = arith.constant 0 : i32
    return %arg0, %c0_i32 : i32, i32
  }
}

</mosaic_0001>

<llo_original>
// kernel: tpu_custom_call.1
$region0: #{tpu_custom_call.1}
  #allocation0 [shape = 'u32[]', space=smem, size = 0x4, offset = 0x4, fixed_abs, tag = 'smem constant byte address 0x4 - core index']
  #allocation1 [shape = 'u32[144,128]{1,0:T(1,128)}', space=vmem, size = 0x12000, scoped, tag = 'internal scratch']
  #allocation2 [shape = 'f32[5,8,32]{2,1,0:T(8,128)}', space=vmem, size = 0x5000, scoped, tag = 'scratch operand']
  #allocation3 [shape = 'f32[8,256]{1,0:T(8,128)}', space=vmem, size = 0x2000, scoped, tag = 'scratch operand']
  #allocation4 [shape = 's32[1]{0}', space=sflag, size = 0x4, scoped, tag = 'scoped memory for tpu_custom_call.1']
  #allocation5 [shape = 'u8[8192]{0}', space=smem, size = 0x2000, scoped, tag = 'prefetched SMEM operand 0']
  %s0 = inlined_call_operand.vmem [shape: s32[16,5], index: 0, kind: input, shape index: {}]
  %s1 = inlined_call_operand.vmem [shape: f32[256,32], index: 1, kind: input, shape index: {}]
  %s2 = inlined_call_operand.vmem [shape: f32[1,256], index: 2, kind: input, shape index: {}]
  %s3 = inlined_call_operand.vmem [shape: bf16[256,256], index: 3, kind: input, shape index: {}]
  %s4 = inlined_call_operand.vmem [shape: f32[1,256], index: 4, kind: input, shape index: {}]
  %s5 = inlined_call_operand.hbm [shape: bf16[256,256], index: 5, kind: input, shape index: {}]
  %s6 = inlined_call_operand.vmem [shape: f32[1,256], index: 6, kind: input, shape index: {}]
  %s7 = inlined_call_operand.hbm [shape: bf16[256,256], index: 7, kind: input, shape index: {}]
  %s8 = inlined_call_operand.vmem [shape: f32[1,256], index: 8, kind: input, shape index: {}]
  %s9 = inlined_call_operand.hbm [shape: bf16[256,128], index: 9, kind: input, shape index: {}]
  %s10 = inlined_call_operand.vmem [shape: f32[1,128], index: 10, kind: input, shape index: {}]
  %s11 = inlined_call_operand.hbm [shape: f32[16,128], index: 11, kind: output, shape index: {}]
  %s12 = sld [smem:[#allocation0]]
  $region85: #{tpu_custom_call.1} parent=0
    _
  %s14 = ssub.s32 1, %s12
  %s15 = scalar_select 0, %s14, %s12
  %s16 = sshll.u32 %s0, 4
  %s17 = int_to_ptr.vmem [resolvable:$true] %s16
  %19 = dma.vmem_to_smem %s17, 256, [#allocation5], [#allocation4]
  %20 = dma.done [#allocation4], 256
  %21 = sfence
  $region1: #{tpu_custom_call.1} parent=0
    #allocation6 [shape = 'u8[131072]{0}', space=vmem, size = 0x20000, scoped, tag = 'input window, operand 5, single buffered']
    #allocation7 [shape = 's32[2]{0}', space=sflag, size = 0x8, scoped, tag = 'scoped memory for tpu_custom_call.1']
    #allocation8 [shape = 's32[2]{0}', space=sflag, size = 0x8, scoped, tag = 'scoped memory for tpu_custom_call.1']
    #allocation9 [shape = 'u8[131072]{0}', space=vmem, size = 0x20000, scoped, tag = 'input window, operand 7, single buffered']
    #allocation10 [shape = 's32[1]{0}', space=sflag, size = 0x4, scoped, tag = 'scoped memory for tpu_custom_call.1']
    #allocation11 [shape = 'u8[65536]{0}', space=vmem, size = 0x10000, scoped, tag = 'input window, operand 9, single buffered']
    #allocation12 [shape = 'u8[8192]{0}', space=vmem, size = 0x2000, scoped, tag = 'output window, operand 0']
    %22 = vsyncpa [#allocation7], 0
    %23 = vsyncpa [#allocation10], 0
    %24 = vsyncpa [#allocation8], 0
    %s25 = scalar_lea.sflag [#allocation8], 1
    %26 = vsyncpa %s25, 0
    loop: start=0, step=1, limit=4
    $region2: #{tpu_custom_call.1} parent=1 // loop_pre_header
      _
    $region3: #{tpu_custom_call.1} parent=1 // loop_header
      %s28 = sphi 0, %s32
      %p29 = scmp.ge.s32.totalorder %s28, 4
      %s38 = sphi 0, %s40
      %s41 = sphi 0, %s38
      %s42 = sphi 0, %s41
      %s58 = sphi 0, %s42
      %s62 = sphi 0, %s62
      %s64 = sphi 0, %s62
      %s65 = sphi 0, %s64
      %s79 = sphi 0, %s65
      %s83 = sphi 0, %s83
      %s85 = sphi 0, %s83
      %s86 = sphi 0, %s85
      %s100 = sphi 0, %s86
      %s104 = sphi 0, %s104
      %s106 = sphi 0, %s104
      %s107 = sphi 0, %s106
      %s121 = sphi 0, %s107
      %s125 = sphi 0, %s125
      %s127 = sphi 0, %s125
      %s128 = sphi 0, %s127
      %s142 = sphi 0, %s128
      %s146 = sphi 0, %s146
      %s148 = sphi 0, %s146
      %s149 = sphi 0, %s148
      %s163 = sphi 0, %s149
      %s167 = sphi 0, %s167
      %s169 = sphi 0, %s167
      %s170 = sphi 0, %s169
      %s184 = sphi 0, %s170
      %s188 = sphi 0, %s188
      %s190 = sphi 0, %s188
      %s191 = sphi 0, %s190
      %s205 = sphi 0, %s191
      %s209 = sphi 0, %s209
      %s211 = sphi 0, %s209
      %s212 = sphi 0, %s211
      %s226 = sphi 0, %s212
      %s230 = sphi 0, %s230
      %s232 = sphi 0, %s230
      %s233 = sphi 0, %s232
      %s247 = sphi 0, %s233
      %s253 = sphi 0, %s255
      %s256 = sphi 0, %s253
      %s257 = sphi 0, %s256
      %s273 = sphi 0, %s257
    $region4: #{tpu_custom_call.1} parent=1 // loop_header_branch
      %31 = sbr.rel (%p29) target = $region8
    $region5: #{tpu_custom_call.1} parent=1 // loop_body
      %s33 = ssub.s32 %s28, 1
      %s34 = ssub.s32 %s28, 2
      %s35 = sadd.s32 %s28, 1
      %s36 = ssub.s32 %s28, %s35
      %p37 = scmp.eq.s32.totalorder %s36, 0
      %s39 = sadd.s32 %s38, 1
      %s40 = scalar_select %p37, %s38, %s39
      %p43 = pneg %p37
      %p44 = scmp.eq.s32.totalorder %s28, 1
      %p45 = por %p43, %p44
      %p46 = scmp.ne.s32.totalorder %s38, %s41
      %p47 = scmp.eq.s32.totalorder %s28, 0
      %p48 = por %p46, %p47
      %p49 = scmp.ne.s32.totalorder %s38, %s41
      %p50 = scmp.eq.s32.totalorder %s33, 1
      %p51 = por %p49, %p50
      %p52 = scmp.ne.s32.totalorder %s41, %s42
      %p53 = scmp.eq.s32.totalorder %s33, 0
      %p54 = por %p52, %p53
      %p55 = scmp.ne.s32.totalorder %s41, %s42
      %p56 = scmp.eq.s32.totalorder %s34, 1
      %p57 = por %p55, %p56
      %p59 = scmp.ne.s32.totalorder %s42, %s58
      %p60 = scmp.eq.s32.totalorder %s34, 0
      %p61 = por %p59, %p60
      %s63 = sadd.s32 %s62, 1
      %p66 = scmp.eq.s32.totalorder %s28, 1
      %p67 = scmp.ne.s32.totalorder %s62, %s64
      %p68 = scmp.eq.s32.totalorder %s28, 0
      %p69 = por %p67, %p68
      %p70 = scmp.ne.s32.totalorder %s62, %s64
      %p71 = scmp.eq.s32.totalorder %s33, 1
      %p72 = por %p70, %p71
      %p73 = scmp.ne.s32.totalorder %s64, %s65
      %p74 = scmp.eq.s32.totalorder %s33, 0
      %p75 = por %p73, %p74
      %p76 = scmp.ne.s32.totalorder %s64, %s65
      %p77 = scmp.eq.s32.totalorder %s34, 1
      %p78 = por %p76, %p77
      %p80 = scmp.ne.s32.totalorder %s65, %s79
      %p81 = scmp.eq.s32.totalorder %s34, 0
      %p82 = por %p80, %p81
      %s84 = sadd.s32 %s83, 1
      %p87 = scmp.eq.s32.totalorder %s28, 1
      %p88 = scmp.ne.s32.totalorder %s83, %s85
      %p89 = scmp.eq.s32.totalorder %s28, 0
      %p90 = por %p88, %p89
      %p91 = scmp.ne.s32.totalorder %s83, %s85
      %p92 = scmp.eq.s32.totalorder %s33, 1
      %p93 = por %p91, %p92
      %p94 = scmp.ne.s32.totalorder %s85, %s86
      %p95 = scmp.eq.s32.totalorder %s33, 0
      %p96 = por %p94, %p95
      %p97 = scmp.ne.s32.totalorder %s85, %s86
      %p98 = scmp.eq.s32.totalorder %s34, 1
      %p99 = por %p97, %p98
      %p101 = scmp.ne.s32.totalorder %s86, %s100
      %p102 = scmp.eq.s32.totalorder %s34, 0
      %p103 = por %p101, %p102
      %s105 = sadd.s32 %s104, 1
      %p108 = scmp.eq.s32.totalorder %s28, 1
      %p109 = scmp.ne.s32.totalorder %s104, %s106
      %p110 = scmp.eq.s32.totalorder %s28, 0
      %p111 = por %p109, %p110
      %p112 = scmp.ne.s32.totalorder %s104, %s106
      %p113 = scmp.eq.s32.totalorder %s33, 1
      %p114 = por %p112, %p113
      %p115 = scmp.ne.s32.totalorder %s106, %s107
      %p116 = scmp.eq.s32.totalorder %s33, 0
      %p117 = por %p115, %p116
      %p118 = scmp.ne.s32.totalorder %s106, %s107
      %p119 = scmp.eq.s32.totalorder %s34, 1
      %p120 = por %p118, %p119
      %p122 = scmp.ne.s32.totalorder %s107, %s121
      %p123 = scmp.eq.s32.totalorder %s34, 0
      %p124 = por %p122, %p123
      %s126 = sadd.s32 %s125, 1
      %p129 = scmp.eq.s32.totalorder %s28, 1
      %p130 = scmp.ne.s32.totalorder %s125, %s127
      %p131 = scmp.eq.s32.totalorder %s28, 0
      %p132 = por %p130, %p131
      %p133 = scmp.ne.s32.totalorder %s125, %s127
      %p134 = scmp.eq.s32.totalorder %s33, 1
      %p135 = por %p133, %p134
      %p136 = scmp.ne.s32.totalorder %s127, %s128
      %p137 = scmp.eq.s32.totalorder %s33, 0
      %p138 = por %p136, %p137
      %p139 = scmp.ne.s32.totalorder %s127, %s128
      %p140 = scmp.eq.s32.totalorder %s34, 1
      %p141 = por %p139, %p140
      %p143 = scmp.ne.s32.totalorder %s128, %s142
      %p144 = scmp.eq.s32.totalorder %s34, 0
      %p145 = por %p143, %p144
      %s147 = sadd.s32 %s146, 1
      %p150 = scmp.eq.s32.totalorder %s28, 1
      %p151 = scmp.ne.s32.totalorder %s146, %s148
      %p152 = scmp.eq.s32.totalorder %s28, 0
      %p153 = por %p151, %p152
      %p154 = scmp.ne.s32.totalorder %s146, %s148
      %p155 = scmp.eq.s32.totalorder %s33, 1
      %p156 = por %p154, %p155
      %p157 = scmp.ne.s32.totalorder %s148, %s149
      %p158 = scmp.eq.s32.totalorder %s33, 0
      %p159 = por %p157, %p158
      %p160 = scmp.ne.s32.totalorder %s148, %s149
      %p161 = scmp.eq.s32.totalorder %s34, 1
      %p162 = por %p160, %p161
      %p164 = scmp.ne.s32.totalorder %s149, %s163
      %p165 = scmp.eq.s32.totalorder %s34, 0
      %p166 = por %p164, %p165
      %s168 = sadd.s32 %s167, 1
      %p171 = scmp.eq.s32.totalorder %s28, 1
      %p172 = scmp.ne.s32.totalorder %s167, %s169
      %p173 = scmp.eq.s32.totalorder %s28, 0
      %p174 = por %p172, %p173
      %p175 = scmp.ne.s32.totalorder %s167, %s169
      %p176 = scmp.eq.s32.totalorder %s33, 1
      %p177 = por %p175, %p176
      %p178 = scmp.ne.s32.totalorder %s169, %s170
      %p179 = scmp.eq.s32.totalorder %s33, 0
      %p180 = por %p178, %p179
      %p181 = scmp.ne.s32.totalorder %s169, %s170
      %p182 = scmp.eq.s32.totalorder %s34, 1
      %p183 = por %p181, %p182
      %p185 = scmp.ne.s32.totalorder %s170, %s184
      %p186 = scmp.eq.s32.totalorder %s34, 0
      %p187 = por %p185, %p186
      %s189 = sadd.s32 %s188, 1
      %p192 = scmp.eq.s32.totalorder %s28, 1
      %p193 = scmp.ne.s32.totalorder %s188, %s190
      %p194 = scmp.eq.s32.totalorder %s28, 0
      %p195 = por %p193, %p194
      %p196 = scmp.ne.s32.totalorder %s188, %s190
      %p197 = scmp.eq.s32.totalorder %s33, 1
      %p198 = por %p196, %p197
      %p199 = scmp.ne.s32.totalorder %s190, %s191
      %p200 = scmp.eq.s32.totalorder %s33, 0
      %p201 = por %p199, %p200
      %p202 = scmp.ne.s32.totalorder %s190, %s191
      %p203 = scmp.eq.s32.totalorder %s34, 1
      %p204 = por %p202, %p203
      %p206 = scmp.ne.s32.totalorder %s191, %s205
      %p207 = scmp.eq.s32.totalorder %s34, 0
      %p208 = por %p206, %p207
      %s210 = sadd.s32 %s209, 1
      %p213 = scmp.eq.s32.totalorder %s28, 1
      %p214 = scmp.ne.s32.totalorder %s209, %s211
      %p215 = scmp.eq.s32.totalorder %s28, 0
      %p216 = por %p214, %p215
      %p217 = scmp.ne.s32.totalorder %s209, %s211
      %p218 = scmp.eq.s32.totalorder %s33, 1
      %p219 = por %p217, %p218
      %p220 = scmp.ne.s32.totalorder %s211, %s212
      %p221 = scmp.eq.s32.totalorder %s33, 0
      %p222 = por %p220, %p221
      %p223 = scmp.ne.s32.totalorder %s211, %s212
      %p224 = scmp.eq.s32.totalorder %s34, 1
      %p225 = por %p223, %p224
      %p227 = scmp.ne.s32.totalorder %s212, %s226
      %p228 = scmp.eq.s32.totalorder %s34, 0
      %p229 = por %p227, %p228
      %s231 = sadd.s32 %s230, 1
      %p234 = scmp.eq.s32.totalorder %s28, 1
      %p235 = scmp.ne.s32.totalorder %s230, %s232
      %p236 = scmp.eq.s32.totalorder %s28, 0
      %p237 = por %p235, %p236
      %p238 = scmp.ne.s32.totalorder %s230, %s232
      %p239 = scmp.eq.s32.totalorder %s33, 1
      %p240 = por %p238, %p239
      %p241 = scmp.ne.s32.totalorder %s232, %s233
      %p242 = scmp.eq.s32.totalorder %s33, 0
      %p243 = por %p241, %p242
      %p244 = scmp.ne.s32.totalorder %s232, %s233
      %p245 = scmp.eq.s32.totalorder %s34, 1
      %p246 = por %p244, %p245
      %p248 = scmp.ne.s32.totalorder %s233, %s247
      %p249 = scmp.eq.s32.totalorder %s34, 0
      %p250 = por %p248, %p249
      %s251 = ssub.s32 %s28, %s35
      %p252 = scmp.eq.s32.totalorder %s251, 0
      %s254 = sadd.s32 %s253, 1
      %s255 = scalar_select %p252, %s253, %s254
      %p258 = pneg %p252
      %p259 = scmp.eq.s32.totalorder %s28, 1
      %p260 = por %p258, %p259
      %p261 = scmp.ne.s32.totalorder %s253, %s256
      %p262 = scmp.eq.s32.totalorder %s28, 0
      %p263 = por %p261, %p262
      %p264 = scmp.ne.s32.totalorder %s253, %s256
      %p265 = scmp.eq.s32.totalorder %s33, 1
      %p266 = por %p264, %p265
      %p267 = scmp.ne.s32.totalorder %s256, %s257
      %p268 = scmp.eq.s32.totalorder %s33, 0
      %p269 = por %p267, %p268
      %p270 = scmp.ne.s32.totalorder %s256, %s257
      %p271 = scmp.eq.s32.totalorder %s34, 1
      %p272 = por %p270, %p271
      %p274 = scmp.ne.s32.totalorder %s257, %s273
      %p275 = scmp.eq.s32.totalorder %s34, 0
      %p276 = por %p274, %p275
      %p277 = scmp.le.s32.totalorder 1, %s28
      %p278 = scmp.lt.s32.totalorder %s28, 3
      %p279 = pnand %p277, %p278
      %p280 = pneg %p279
      // Predicated region
      $region9: #{tpu_custom_call.1} parent=5 // pred_check
        _
      $region10: #{tpu_custom_call.1} parent=5 // pred_check_branch
        %282 = sbr.rel (%p279) target = $region12
      $region11: #{tpu_custom_call.1} parent=5 // pred_region
        %s283 = ssub.s32 %s28, 1
        // Predicated region
        $region13: #{tpu_custom_call.1} parent=11 // pred_check
          %p284 = pneg %p75
        $region14: #{tpu_custom_call.1} parent=11 // pred_check_branch
          %286 = sbr.rel (%p284) target = $region16
        $region15: #{tpu_custom_call.1} parent=11 // pred_region
          _
        $region16: #{tpu_custom_call.1} parent=11 // pred_fallthru
          _
        // Predicated region
        $region17: #{tpu_custom_call.1} parent=11 // pred_check
          %p287 = pneg %p96
        $region18: #{tpu_custom_call.1} parent=11 // pred_check_branch
          %289 = sbr.rel (%p287) target = $region20
        $region19: #{tpu_custom_call.1} parent=11 // pred_region
          _
        $region20: #{tpu_custom_call.1} parent=11 // pred_fallthru
          _
        // Predicated region
        $region21: #{tpu_custom_call.1} parent=11 // pred_check
          %p290 = pneg %p117
        $region22: #{tpu_custom_call.1} parent=11 // pred_check_branch
          %292 = sbr.rel (%p290) target = $region24
        $region23: #{tpu_custom_call.1} parent=11 // pred_region
          _
        $region24: #{tpu_custom_call.1} parent=11 // pred_fallthru
          _
        // Predicated region
        $region25: #{tpu_custom_call.1} parent=11 // pred_check
          %p293 = pneg %p138
        $region26: #{tpu_custom_call.1} parent=11 // pred_check_branch
          %295 = sbr.rel (%p293) target = $region28
        $region27: #{tpu_custom_call.1} parent=11 // pred_region
          %s297 = ssub.s32 4096, 4096
          %298 = vsyncadd [#allocation7], %s297
          %s299 = sshll.u32 [#allocation6], 4
          %s300 = int_to_ptr.vmem [resolvable:$true] %s299
          %305 = dma.hbm_to_vmem [thread:$0]  %s5, 4096, %s300, [#allocation7], 128, 128, 8
        $region28: #{tpu_custom_call.1} parent=11 // pred_fallthru
          _
        // Predicated region
        $region29: #{tpu_custom_call.1} parent=11 // pred_check
          %p306 = pneg %p159
        $region30: #{tpu_custom_call.1} parent=11 // pred_check_branch
          %308 = sbr.rel (%p306) target = $region32
        $region31: #{tpu_custom_call.1} parent=11 // pred_region
          _
        $region32: #{tpu_custom_call.1} parent=11 // pred_fallthru
          _
        // Predicated region
        $region33: #{tpu_custom_call.1} parent=11 // pred_check
          %p309 = pneg %p180
        $region34: #{tpu_custom_call.1} parent=11 // pred_check_branch
          %311 = sbr.rel (%p309) target = $region36
        $region35: #{tpu_custom_call.1} parent=11 // pred_region
          %s313 = ssub.s32 4096, 4096
          %314 = vsyncadd [#allocation10], %s313
          %s315 = sshll.u32 [#allocation9], 4
          %s316 = int_to_ptr.vmem [resolvable:$true] %s315
          %321 = dma.hbm_to_vmem [thread:$0]  %s7, 4096, %s316, [#allocation10], 128, 128, 8
        $region36: #{tpu_custom_call.1} parent=11 // pred_fallthru
          _
        // Predicated region
        $region37: #{tpu_custom_call.1} parent=11 // pred_check
          %p322 = pneg %p201
        $region38: #{tpu_custom_call.1} parent=11 // pred_check_branch
          %324 = sbr.rel (%p322) target = $region40
        $region39: #{tpu_custom_call.1} parent=11 // pred_region
          _
        $region40: #{tpu_custom_call.1} parent=11 // pred_fallthru
          _
        // Predicated region
        $region41: #{tpu_custom_call.1} parent=11 // pred_check
          %p325 = pneg %p222
        $region42: #{tpu_custom_call.1} parent=11 // pred_check_branch
          %327 = sbr.rel (%p325) target = $region44
        $region43: #{tpu_custom_call.1} parent=11 // pred_region
          %s329 = ssub.s32 2048, 2048
          %330 = vsyncadd [#allocation10], %s329
          %s331 = sshll.u32 [#allocation11], 4
          %s332 = int_to_ptr.vmem [resolvable:$true] %s331
          %337 = dma.hbm_to_vmem [thread:$0]  %s9, 2048, %s332, [#allocation10], 64, 64, 4
        $region44: #{tpu_custom_call.1} parent=11 // pred_fallthru
          _
        // Predicated region
        $region45: #{tpu_custom_call.1} parent=11 // pred_check
          %p338 = pneg %p243
        $region46: #{tpu_custom_call.1} parent=11 // pred_check_branch
          %340 = sbr.rel (%p338) target = $region48
        $region47: #{tpu_custom_call.1} parent=11 // pred_region
          _
        $region48: #{tpu_custom_call.1} parent=11 // pred_fallthru
          _
      $region12: #{tpu_custom_call.1} parent=5 // pred_fallthru
        _
      %p341 = scmp.lt.s32.totalorder %s28, 2
      // Predicated region
      $region49: #{tpu_custom_call.1} parent=5 // pred_check
        %p342 = pneg %p341
      $region50: #{tpu_custom_call.1} parent=5 // pred_check_branch
        %344 = sbr.rel (%p342) target = $region52
      $region51: #{tpu_custom_call.1} parent=5 // pred_region
        // Predicated region
        $region53: #{tpu_custom_call.1} parent=51 // pred_check
          %p345 = pneg %p48
        $region54: #{tpu_custom_call.1} parent=51 // pred_check_branch
          %347 = sbr.rel (%p345) target = $region56
        $region55: #{tpu_custom_call.1} parent=51 // pred_region
          %s348 = smul.u32 16, %s28
          %p349 = scmp.lt.s32.totalorder %s348, 31
          %s350 = scalar_select %p349, %s348, 31
          %s351 = smul.addr %s350, 8
          %s352 = scalar_lea.vmem %s1, %s351
          %s353 = smul.u32 16, %s28
        $region56: #{tpu_custom_call.1} parent=51 // pred_fallthru
          _
      $region52: #{tpu_custom_call.1} parent=5 // pred_fallthru
        _
      %p354 = scmp.le.s32.totalorder 1, %s28
      %p355 = scmp.lt.s32.totalorder %s28, 3
      %p356 = pnand %p354, %p355
      %p357 = pneg %p356
      // Predicated region
      $region57: #{tpu_custom_call.1} parent=5 // pred_check
        _
      $region58: #{tpu_custom_call.1} parent=5 // pred_check_branch
        %359 = sbr.rel (%p356) target = $region60
      $region59: #{tpu_custom_call.1} parent=5 // pred_region
        %s360 = ssub.s32 %s28, 1
        // Predicated region
        $region61: #{tpu_custom_call.1} parent=59 // pred_check
          %p361 = pneg %p138
        $region62: #{tpu_custom_call.1} parent=59 // pred_check_branch
          %363 = sbr.rel (%p361) target = $region64
        $region63: #{tpu_custom_call.1} parent=59 // pred_region
          %364 = dma.done [#allocation7], 4096
        $region64: #{tpu_custom_call.1} parent=59 // pred_fallthru
          _
        // Predicated region
        $region65: #{tpu_custom_call.1} parent=59 // pred_check
          %p365 = pneg %p180
        $region66: #{tpu_custom_call.1} parent=59 // pred_check_branch
          %367 = sbr.rel (%p365) target = $region68
        $region67: #{tpu_custom_call.1} parent=59 // pred_region
          %368 = dma.done [#allocation10], 4096
        $region68: #{tpu_custom_call.1} parent=59 // pred_fallthru
          _
        // Predicated region
        $region69: #{tpu_custom_call.1} parent=59 // pred_check
          %p369 = pneg %p222
        $region70: #{tpu_custom_call.1} parent=59 // pred_check_branch
          %371 = sbr.rel (%p369) target = $region72
        $region71: #{tpu_custom_call.1} parent=59 // pred_region
          %372 = dma.done [#allocation10], 2048
        $region72: #{tpu_custom_call.1} parent=59 // pred_fallthru
          _
        %s373 = smul.u32 16, %s33
        %p374 = scmp.lt.s32.totalorder %s373, 31
        %s375 = scalar_select %p374, %s373, 31
        %s376 = smul.addr %s375, 8
        %s377 = scalar_lea.vmem %s1, %s376
        %p378 = pneg %p54
        %p379 = pneg %p51
        %p380 = pneg %p75
        %p381 = pneg %p72
        %p382 = pneg %p96
        %p383 = pneg %p93
        %p384 = pneg %p117
        %p385 = pneg %p114
        %p386 = pneg %p138
        %p387 = pneg %p135
        %p388 = pneg %p159
        %p389 = pneg %p156
        %p390 = pneg %p180
        %p391 = pneg %p177
        %p392 = pneg %p201
        %p393 = pneg %p198
        %p394 = pneg %p222
        %p395 = pneg %p219
        %p396 = pneg %p243
        %p397 = pneg %p240
        %p398 = pneg %p269
        %p399 = pneg %p266
        %s400 = sand.u32 %s256, 1
        %s401 = scalar_lea.sflag [#allocation8], %s400
        %s402 = sand.u32 %s256, 1
        %s403 = smul.addr %s402, 8
        %s404 = scalar_lea.vmem [#allocation12], %s403
        %s405 = smul.u32 16, %s33
        %p406 = scmp.lt.s32.totalorder %s405, 31
        %s407 = scalar_select %p406, %s405, 31
        %s408 = smul.addr %s407, 8
        %s409 = scalar_lea.vmem %s1, %s408
        %s410 = smul.u32 16, %s33
        %s412 = smul.u32 %s33, 8
        %s413 = smul.u32 %s412, 128
        %s414 = sld [smem:[#allocation5 + %s413]]
        %s415 = scalar_lea.vmem %s409, %s414
        %v416 = vld [vmem:[%s415] sm:$0x1]
        %vm417 = vcmask 253952
        %418 = vst.msk [vmem:[#allocation2] sm:$0x1] %vm417, %v416
        %s419 = sadd.s32 %s413, 1
        %s420 = sld [smem:[#allocation5 + %s419]]
        %s421 = scalar_lea.vmem %s409, %s420
        %v422 = vld [vmem:[%s421] sm:$0x1]
        %s423 = scalar_lea.vmem [#allocation2], 8
        %424 = vst.msk [vmem:[%s423] sm:$0x1] %vm417, %v422
        %s425 = sadd.s32 %s413, 2
        %s426 = sld [smem:[#allocation5 + %s425]]
        %s427 = scalar_lea.vmem %s409, %s426
        %v428 = vld [vmem:[%s427] sm:$0x1]
        %s429 = scalar_lea.vmem [#allocation2], 16
        %430 = vst.msk [vmem:[%s429] sm:$0x1] %vm417, %v428
        %s431 = sadd.s32 %s413, 3
        %s432 = sld [smem:[#allocation5 + %s431]]
        %s433 = scalar_lea.vmem %s409, %s432
        %v434 = vld [vmem:[%s433] sm:$0x1]
        %s435 = scalar_lea.vmem [#allocation2], 24
        %436 = vst.msk [vmem:[%s435] sm:$0x1] %vm417, %v434
        %s437 = sadd.s32 %s413, 4
        %s438 = sld [smem:[#allocation5 + %s437]]
        %s439 = scalar_lea.vmem %s409, %s438
        %v440 = vld [vmem:[%s439] sm:$0x1]
        %s441 = scalar_lea.vmem [#allocation2], 32
        %442 = vst.msk [vmem:[%s441] sm:$0x1] %vm417, %v440
        %s443 = sadd.s32 %s412, 1
        %s444 = smul.u32 %s443, 128
        %s445 = sld [smem:[#allocation5 + %s444]]
        %s446 = sadd.s32 %s445, 16
        %s447 = scalar_lea.vmem %s409, %s446
        %v448 = vld [vmem:[%s447] sm:$0x1]
        %449 = vst.msk [vmem:[#allocation2 + $0x1] sm:$0x1] %vm417, %v448
        %s450 = sadd.s32 %s444, 1
        %s451 = sld [smem:[#allocation5 + %s450]]
        %s452 = sadd.s32 %s451, 16
        %s453 = scalar_lea.vmem %s409, %s452
        %v454 = vld [vmem:[%s453] sm:$0x1]
        %455 = vst.msk [vmem:[%s423 + $0x1] sm:$0x1] %vm417, %v454
        %s456 = sadd.s32 %s444, 2
        %s457 = sld [smem:[#allocation5 + %s456]]
        %s458 = sadd.s32 %s457, 16
        %s459 = scalar_lea.vmem %s409, %s458
        %v460 = vld [vmem:[%s459] sm:$0x1]
        %461 = vst.msk [vmem:[%s429 + $0x1] sm:$0x1] %vm417, %v460
        %s462 = sadd.s32 %s444, 3
        %s463 = sld [smem:[#allocation5 + %s462]]
        %s464 = sadd.s32 %s463, 16
        %s465 = scalar_lea.vmem %s409, %s464
        %v466 = vld [vmem:[%s465] sm:$0x1]
        %467 = vst.msk [vmem:[%s435 + $0x1] sm:$0x1] %vm417, %v466
        %s468 = sadd.s32 %s444, 4
        %s469 = sld [smem:[#allocation5 + %s468]]
        %s470 = sadd.s32 %s469, 16
        %s471 = scalar_lea.vmem %s409, %s470
        %v472 = vld [vmem:[%s471] sm:$0x1]
        %473 = vst.msk [vmem:[%s441 + $0x1] sm:$0x1] %vm417, %v472
        %s474 = sadd.s32 %s412, 2
        %s475 = smul.u32 %s474, 128
        %s476 = sld [smem:[#allocation5 + %s475]]
        %s477 = sadd.s32 %s476, 32
        %s478 = scalar_lea.vmem %s409, %s477
        %v479 = vld [vmem:[%s478] sm:$0x1]
        %480 = vst.msk [vmem:[#allocation2 + $0x2] sm:$0x1] %vm417, %v479
        %s481 = sadd.s32 %s475, 1
        %s482 = sld [smem:[#allocation5 + %s481]]
        %s483 = sadd.s32 %s482, 32
        %s484 = scalar_lea.vmem %s409, %s483
        %v485 = vld [vmem:[%s484] sm:$0x1]
        %486 = vst.msk [vmem:[%s423 + $0x2] sm:$0x1] %vm417, %v485
        %s487 = sadd.s32 %s475, 2
        %s488 = sld [smem:[#allocation5 + %s487]]
        %s489 = sadd.s32 %s488, 32
        %s490 = scalar_lea.vmem %s409, %s489
        %v491 = vld [vmem:[%s490] sm:$0x1]
        %492 = vst.msk [vmem:[%s429 + $0x2] sm:$0x1] %vm417, %v491
        %s493 = sadd.s32 %s475, 3
        %s494 = sld [smem:[#allocation5 + %s493]]
        %s495 = sadd.s32 %s494, 32
        %s496 = scalar_lea.vmem %s409, %s495
        %v497 = vld [vmem:[%s496] sm:$0x1]
        %498 = vst.msk [vmem:[%s435 + $0x2] sm:$0x1] %vm417, %v497
        %s499 = sadd.s32 %s475, 4
        %s500 = sld [smem:[#allocation5 + %s499]]
        %s501 = sadd.s32 %s500, 32
        %s502 = scalar_lea.vmem %s409, %s501
        %v503 = vld [vmem:[%s502] sm:$0x1]
        %504 = vst.msk [vmem:[%s441 + $0x2] sm:$0x1] %vm417, %v503
        %s505 = sadd.s32 %s412, 3
        %s506 = smul.u32 %s505, 128
        %s507 = sld [smem:[#allocation5 + %s506]]
        %s508 = sadd.s32 %s507, 48
        %s509 = scalar_lea.vmem %s409, %s508
        %v510 = vld [vmem:[%s509] sm:$0x1]
        %511 = vst.msk [vmem:[#allocation2 + $0x3] sm:$0x1] %vm417, %v510
        %s512 = sadd.s32 %s506, 1
        %s513 = sld [smem:[#allocation5 + %s512]]
        %s514 = sadd.s32 %s513, 48
        %s515 = scalar_lea.vmem %s409, %s514
        %v516 = vld [vmem:[%s515] sm:$0x1]
        %517 = vst.msk [vmem:[%s423 + $0x3] sm:$0x1] %vm417, %v516
        %s518 = sadd.s32 %s506, 2
        %s519 = sld [smem:[#allocation5 + %s518]]
        %s520 = sadd.s32 %s519, 48
        %s521 = scalar_lea.vmem %s409, %s520
        %v522 = vld [vmem:[%s521] sm:$0x1]
        %523 = vst.msk [vmem:[%s429 + $0x3] sm:$0x1] %vm417, %v522
        %s524 = sadd.s32 %s506, 3
        %s525 = sld [smem:[#allocation5 + %s524]]
        %s526 = sadd.s32 %s525, 48
        %s527 = scalar_lea.vmem %s409, %s526
        %v528 = vld [vmem:[%s527] sm:$0x1]
        %529 = vst.msk [vmem:[%s435 + $0x3] sm:$0x1] %vm417, %v528
        %s530 = sadd.s32 %s506, 4
        %s531 = sld [smem:[#allocation5 + %s530]]
        %s532 = sadd.s32 %s531, 48
        %s533 = scalar_lea.vmem %s409, %s532
        %v534 = vld [vmem:[%s533] sm:$0x1]
        %535 = vst.msk [vmem:[%s441 + $0x3] sm:$0x1] %vm417, %v534
        %s536 = sadd.s32 %s412, 4
        %s537 = smul.u32 %s536, 128
        %s538 = sld [smem:[#allocation5 + %s537]]
        %s539 = sadd.s32 %s538, 64
        %s540 = scalar_lea.vmem %s409, %s539
        %v541 = vld [vmem:[%s540] sm:$0x1]
        %542 = vst.msk [vmem:[#allocation2 + $0x4] sm:$0x1] %vm417, %v541
        %s543 = sadd.s32 %s537, 1
        %s544 = sld [smem:[#allocation5 + %s543]]
        %s545 = sadd.s32 %s544, 64
        %s546 = scalar_lea.vmem %s409, %s545
        %v547 = vld [vmem:[%s546] sm:$0x1]
        %548 = vst.msk [vmem:[%s423 + $0x4] sm:$0x1] %vm417, %v547
        %s549 = sadd.s32 %s537, 2
        %s550 = sld [smem:[#allocation5 + %s549]]
        %s551 = sadd.s32 %s550, 64
        %s552 = scalar_lea.vmem %s409, %s551
        %v553 = vld [vmem:[%s552] sm:$0x1]
        %554 = vst.msk [vmem:[%s429 + $0x4] sm:$0x1] %vm417, %v553
        %s555 = sadd.s32 %s537, 3
        %s556 = sld [smem:[#allocation5 + %s555]]
        %s557 = sadd.s32 %s556, 64
        %s558 = scalar_lea.vmem %s409, %s557
        %v559 = vld [vmem:[%s558] sm:$0x1]
        %560 = vst.msk [vmem:[%s435 + $0x4] sm:$0x1] %vm417, %v559
        %s561 = sadd.s32 %s537, 4
        %s562 = sld [smem:[#allocation5 + %s561]]
        %s563 = sadd.s32 %s562, 64
        %s564 = scalar_lea.vmem %s409, %s563
        %v565 = vld [vmem:[%s564] sm:$0x1]
        %566 = vst.msk [vmem:[%s441 + $0x4] sm:$0x1] %vm417, %v565
        %s567 = sadd.s32 %s412, 5
        %s568 = smul.u32 %s567, 128
        %s569 = sld [smem:[#allocation5 + %s568]]
        %s570 = sadd.s32 %s569, 80
        %s571 = scalar_lea.vmem %s409, %s570
        %v572 = vld [vmem:[%s571] sm:$0x1]
        %573 = vst.msk [vmem:[#allocation2 + $0x5] sm:$0x1] %vm417, %v572
        %s574 = sadd.s32 %s568, 1
        %s575 = sld [smem:[#allocation5 + %s574]]
        %s576 = sadd.s32 %s575, 80
        %s577 = scalar_lea.vmem %s409, %s576
        %v578 = vld [vmem:[%s577] sm:$0x1]
        %579 = vst.msk [vmem:[%s423 + $0x5] sm:$0x1] %vm417, %v578
        %s580 = sadd.s32 %s568, 2
        %s581 = sld [smem:[#allocation5 + %s580]]
        %s582 = sadd.s32 %s581, 80
        %s583 = scalar_lea.vmem %s409, %s582
        %v584 = vld [vmem:[%s583] sm:$0x1]
        %585 = vst.msk [vmem:[%s429 + $0x5] sm:$0x1] %vm417, %v584
        %s586 = sadd.s32 %s568, 3
        %s587 = sld [smem:[#allocation5 + %s586]]
        %s588 = sadd.s32 %s587, 80
        %s589 = scalar_lea.vmem %s409, %s588
        %v590 = vld [vmem:[%s589] sm:$0x1]
        %591 = vst.msk [vmem:[%s435 + $0x5] sm:$0x1] %vm417, %v590
        %s592 = sadd.s32 %s568, 4
        %s593 = sld [smem:[#allocation5 + %s592]]
        %s594 = sadd.s32 %s593, 80
        %s595 = scalar_lea.vmem %s409, %s594
        %v596 = vld [vmem:[%s595] sm:$0x1]
        %597 = vst.msk [vmem:[%s441 + $0x5] sm:$0x1] %vm417, %v596
        %s598 = sadd.s32 %s412, 6
        %s599 = smul.u32 %s598, 128
        %s600 = sld [smem:[#allocation5 + %s599]]
        %s601 = sadd.s32 %s600, 96
        %s602 = scalar_lea.vmem %s409, %s601
        %v603 = vld [vmem:[%s602] sm:$0x1]
        %604 = vst.msk [vmem:[#allocation2 + $0x6] sm:$0x1] %vm417, %v603
        %s605 = sadd.s32 %s599, 1
        %s606 = sld [smem:[#allocation5 + %s605]]
        %s607 = sadd.s32 %s606, 96
        %s608 = scalar_lea.vmem %s409, %s607
        %v609 = vld [vmem:[%s608] sm:$0x1]
        %610 = vst.msk [vmem:[%s423 + $0x6] sm:$0x1] %vm417, %v609
        %s611 = sadd.s32 %s599, 2
        %s612 = sld [smem:[#allocation5 + %s611]]
        %s613 = sadd.s32 %s612, 96
        %s614 = scalar_lea.vmem %s409, %s613
        %v615 = vld [vmem:[%s614] sm:$0x1]
        %616 = vst.msk [vmem:[%s429 + $0x6] sm:$0x1] %vm417, %v615
        %s617 = sadd.s32 %s599, 3
        %s618 = sld [smem:[#allocation5 + %s617]]
        %s619 = sadd.s32 %s618, 96
        %s620 = scalar_lea.vmem %s409, %s619
        %v621 = vld [vmem:[%s620] sm:$0x1]
        %622 = vst.msk [vmem:[%s435 + $0x6] sm:$0x1] %vm417, %v621
        %s623 = sadd.s32 %s599, 4
        %s624 = sld [smem:[#allocation5 + %s623]]
        %s625 = sadd.s32 %s624, 96
        %s626 = scalar_lea.vmem %s409, %s625
        %v627 = vld [vmem:[%s626] sm:$0x1]
        %628 = vst.msk [vmem:[%s441 + $0x6] sm:$0x1] %vm417, %v627
        %s629 = sadd.s32 %s412, 7
        %s630 = smul.u32 %s629, 128
        %s631 = sld [smem:[#allocation5 + %s630]]
        %s632 = sadd.s32 %s631, 112
        %s633 = scalar_lea.vmem %s409, %s632
        %v634 = vld [vmem:[%s633] sm:$0x1]
        %635 = vst.msk [vmem:[#allocation2 + $0x7] sm:$0x1] %vm417, %v634
        %s636 = sadd.s32 %s630, 1
        %s637 = sld [smem:[#allocation5 + %s636]]
        %s638 = sadd.s32 %s637, 112
        %s639 = scalar_lea.vmem %s409, %s638
        %v640 = vld [vmem:[%s639] sm:$0x1]
        %641 = vst.msk [vmem:[%s423 + $0x7] sm:$0x1] %vm417, %v640
        %s642 = sadd.s32 %s630, 2
        %s643 = sld [smem:[#allocation5 + %s642]]
        %s644 = sadd.s32 %s643, 112
        %s645 = scalar_lea.vmem %s409, %s644
        %v646 = vld [vmem:[%s645] sm:$0x1]
        %647 = vst.msk [vmem:[%s429 + $0x7] sm:$0x1] %vm417, %v646
        %s648 = sadd.s32 %s630, 3
        %s649 = sld [smem:[#allocation5 + %s648]]
        %s650 = sadd.s32 %s649, 112
        %s651 = scalar_lea.vmem %s409, %s650
        %v652 = vld [vmem:[%s651] sm:$0x1]
        %653 = vst.msk [vmem:[%s435 + $0x7] sm:$0x1] %vm417, %v652
        %s654 = sadd.s32 %s630, 4
        %s655 = sld [smem:[#allocation5 + %s654]]
        %s656 = sadd.s32 %s655, 112
        %s657 = scalar_lea.vmem %s409, %s656
        %v658 = vld [vmem:[%s657] sm:$0x1]
        %659 = vst.msk [vmem:[%s441 + $0x7] sm:$0x1] %vm417, %v658
        %v660 = vld [vmem:[#allocation2] sm:$0xff]
        %v661 = vld [vmem:[%s423] sm:$0xff]
        %v662 = vld [vmem:[%s429] sm:$0xff]
        %v663 = vld [vmem:[%s435] sm:$0xff]
        %v664 = vld [vmem:[%s441] sm:$0xff]
        %vm665 = vcmask 1048320
        %666 = vst.msk [vmem:[#allocation3 + $0x8] sm:$0xff] %vm665, 0.0
        %v667 = vmul.f32 %v660, %v661
        %v668 = vmul.f32 %v662, %v663
        %vm669 = vcmask 261120
        %670 = vst.msk [vmem:[#allocation3] sm:$0xff] %vm669, %v660
        %672 = vrot.lane.b32.xlu0 %v661, 32
        %v673 = vpop.permute.xlu0 %672
        %vm675 = vcmask 523520
        %676 = vst.msk [vmem:[#allocation3] sm:$0xff] %vm675, %v673
        %678 = vrot.lane.b32.xlu0 %v667, 64
        %v679 = vpop.permute.xlu0 %678
        %vm681 = vcmask 785920
        %682 = vst.msk [vmem:[#allocation3] sm:$0xff] %vm681, %v679
        %684 = vrot.lane.b32.xlu0 %v662, 96
        %v685 = vpop.permute.xlu0 %684
        %687 = vst.msk [vmem:[#allocation3] sm:$0xff] %vm665, %v685
        %688 = vst.msk [vmem:[#allocation3 + $0x8] sm:$0xff] %vm669, %v663
        %690 = vrot.lane.b32.xlu0 %v668, 32
        %v691 = vpop.permute.xlu0 %690
        %693 = vst.msk [vmem:[#allocation3 + $0x8] sm:$0xff] %vm675, %v691
        %695 = vrot.lane.b32.xlu0 %v664, 64
        %v696 = vpop.permute.xlu0 %695
        %698 = vst.msk [vmem:[#allocation3 + $0x8] sm:$0xff] %vm681, %v696
        %v699 = vld [vmem:[#allocation3] sm:$0xff]
        %v700 = vld [vmem:[#allocation3 + $0x8] sm:$0xff]
        %v701 = vld [vmem:[%s2] sm:$0x3]
        %v703 = vlaneseq
        %v704 = vshrl.u32 %v703, 7
        %v705 = vsub.s32 0, %v704
        %v706 = vrot.slane %v701, %v705
        %v707 = vlaneseq
        %v708 = vshrl.u32 %v707, 7
        %v709 = vsub.s32 1, %v708
        %v710 = vrot.slane %v701, %v709
        %v713 = vmul.f32 %v699, %v706
        %v714 = vmul.f32 %v700, %v710
        %v715 = vld [vmem:[%s3] sm:$0xff]
        %v716 = vld [vmem:[%s3 + $0x8] sm:$0xff]
        %v717 = vld [vmem:[%s3 + $0x10] sm:$0xff]
        %v718 = vld [vmem:[%s3 + $0x18] sm:$0xff]
        %v719 = vld [vmem:[%s3 + $0x20] sm:$0xff]
        %v720 = vld [vmem:[%s3 + $0x28] sm:$0xff]
        %v721 = vld [vmem:[%s3 + $0x30] sm:$0xff]
        %v722 = vld [vmem:[%s3 + $0x38] sm:$0xff]
        %v723 = vld [vmem:[%s3 + $0x40] sm:$0xff]
        %v724 = vld [vmem:[%s3 + $0x48] sm:$0xff]
        %v725 = vld [vmem:[%s3 + $0x50] sm:$0xff]
        %v726 = vld [vmem:[%s3 + $0x58] sm:$0xff]
        %v727 = vld [vmem:[%s3 + $0x60] sm:$0xff]
        %v728 = vld [vmem:[%s3 + $0x68] sm:$0xff]
        %v729 = vld [vmem:[%s3 + $0x70] sm:$0xff]
        %v730 = vld [vmem:[%s3 + $0x78] sm:$0xff]
        %v731 = vld [vmem:[%s3 + $0x80] sm:$0xff]
        %v732 = vld [vmem:[%s3 + $0x88] sm:$0xff]
        %v733 = vld [vmem:[%s3 + $0x90] sm:$0xff]
        %v734 = vld [vmem:[%s3 + $0x98] sm:$0xff]
        %v735 = vld [vmem:[%s3 + $0xa0] sm:$0xff]
        %v736 = vld [vmem:[%s3 + $0xa8] sm:$0xff]
        %v737 = vld [vmem:[%s3 + $0xb0] sm:$0xff]
        %v738 = vld [vmem:[%s3 + $0xb8] sm:$0xff]
        %v739 = vld [vmem:[%s3 + $0xc0] sm:$0xff]
        %v740 = vld [vmem:[%s3 + $0xc8] sm:$0xff]
        %v741 = vld [vmem:[%s3 + $0xd0] sm:$0xff]
        %v742 = vld [vmem:[%s3 + $0xd8] sm:$0xff]
        %v743 = vld [vmem:[%s3 + $0xe0] sm:$0xff]
        %v744 = vld [vmem:[%s3 + $0xe8] sm:$0xff]
        %v745 = vld [vmem:[%s3 + $0xf0] sm:$0xff]
        %v746 = vld [vmem:[%s3 + $0xf8] sm:$0xff]
        %v747 = vpack.c.bf16 %v713, %v713
        %v748 = vpack.c.bf16 %v714, %v714
        %v749 = vld [vmem:[%s4] sm:$0x3]
        %v751 = vlaneseq
        %v752 = vshrl.u32 %v751, 7
        %v753 = vsub.s32 0, %v752
        %v754 = vrot.slane %v749, %v753
        %v755 = vlaneseq
        %v756 = vshrl.u32 %v755, 7
        %v757 = vsub.s32 1, %v756
        %v758 = vrot.slane %v749, %v757
        %v793 = vunpack.c.l.b16 %v715
        %v794 = vunpack.c.h.b16 %v715
        %v795 = vunpack.c.l.b16 %v716
        %v796 = vunpack.c.h.b16 %v716
        %v797 = vunpack.c.l.b16 %v717
        %v798 = vunpack.c.h.b16 %v717
        %v799 = vunpack.c.l.b16 %v718
        %v800 = vunpack.c.h.b16 %v718
        %v801 = vunpack.c.l.b16 %v719
        %v802 = vunpack.c.h.b16 %v719
        %v803 = vunpack.c.l.b16 %v720
        %v804 = vunpack.c.h.b16 %v720
        %v805 = vunpack.c.l.b16 %v721
        %v806 = vunpack.c.h.b16 %v721
        %v807 = vunpack.c.l.b16 %v722
        %v808 = vunpack.c.h.b16 %v722
        %v809 = vunpack.c.l.b16 %v723
        %v810 = vunpack.c.h.b16 %v723
        %v811 = vunpack.c.l.b16 %v724
        %v812 = vunpack.c.h.b16 %v724
        %v813 = vunpack.c.l.b16 %v725
        %v814 = vunpack.c.h.b16 %v725
        %v815 = vunpack.c.l.b16 %v726
        %v816 = vunpack.c.h.b16 %v726
        %v817 = vunpack.c.l.b16 %v727
        %v818 = vunpack.c.h.b16 %v727
        %v819 = vunpack.c.l.b16 %v728
        %v820 = vunpack.c.h.b16 %v728
        %v821 = vunpack.c.l.b16 %v729
        %v822 = vunpack.c.h.b16 %v729
        %v823 = vunpack.c.l.b16 %v730
        %v824 = vunpack.c.h.b16 %v730
        %v825 = vunpack.c.l.b16 %v731
        %v826 = vunpack.c.h.b16 %v731
        %v827 = vunpack.c.l.b16 %v732
        %v828 = vunpack.c.h.b16 %v732
        %v829 = vunpack.c.l.b16 %v733
        %v830 = vunpack.c.h.b16 %v733
        %v831 = vunpack.c.l.b16 %v734
        %v832 = vunpack.c.h.b16 %v734
        %v833 = vunpack.c.l.b16 %v735
        %v834 = vunpack.c.h.b16 %v735
        %v835 = vunpack.c.l.b16 %v736
        %v836 = vunpack.c.h.b16 %v736
        %v837 = vunpack.c.l.b16 %v737
        %v838 = vunpack.c.h.b16 %v737
        %v839 = vunpack.c.l.b16 %v738
        %v840 = vunpack.c.h.b16 %v738
        %v841 = vunpack.c.l.b16 %v739
        %v842 = vunpack.c.h.b16 %v739
        %v843 = vunpack.c.l.b16 %v740
        %v844 = vunpack.c.h.b16 %v740
        %v845 = vunpack.c.l.b16 %v741
        %v846 = vunpack.c.h.b16 %v741
        %v847 = vunpack.c.l.b16 %v742
        %v848 = vunpack.c.h.b16 %v742
        %v849 = vunpack.c.l.b16 %v743
        %v850 = vunpack.c.h.b16 %v743
        %v851 = vunpack.c.l.b16 %v744
        %v852 = vunpack.c.h.b16 %v744
        %v853 = vunpack.c.l.b16 %v745
        %v854 = vunpack.c.h.b16 %v745
        %v855 = vunpack.c.l.b16 %v746
        %v856 = vunpack.c.h.b16 %v746
        %v857 = vpack.c.b16 %v795, %v793
        %v858 = vpack.c.b16 %v796, %v794
        %v859 = vpack.c.b16 %v799, %v797
        %v860 = vpack.c.b16 %v800, %v798
        %v861 = vpack.c.b16 %v803, %v801
        %v862 = vpack.c.b16 %v804, %v802
        %v863 = vpack.c.b16 %v807, %v805
        %v864 = vpack.c.b16 %v808, %v806
        %v865 = vpack.c.b16 %v811, %v809
        %v866 = vpack.c.b16 %v812, %v810
        %v867 = vpack.c.b16 %v815, %v813
        %v868 = vpack.c.b16 %v816, %v814
        %v869 = vpack.c.b16 %v819, %v817
        %v870 = vpack.c.b16 %v820, %v818
        %v871 = vpack.c.b16 %v823, %v821
        %v872 = vpack.c.b16 %v824, %v822
        %v873 = vpack.c.b16 %v827, %v825
        %v874 = vpack.c.b16 %v828, %v826
        %v875 = vpack.c.b16 %v831, %v829
        %v876 = vpack.c.b16 %v832, %v830
        %v877 = vpack.c.b16 %v835, %v833
        %v878 = vpack.c.b16 %v836, %v834
        %v879 = vpack.c.b16 %v839, %v837
        %v880 = vpack.c.b16 %v840, %v838
        %v881 = vpack.c.b16 %v843, %v841
        %v882 = vpack.c.b16 %v844, %v842
        %v883 = vpack.c.b16 %v847, %v845
        %v884 = vpack.c.b16 %v848, %v846
        %v885 = vpack.c.b16 %v851, %v849
        %v886 = vpack.c.b16 %v852, %v850
        %v887 = vpack.c.b16 %v855, %v853
        %v888 = vpack.c.b16 %v856, %v854
        %921 = vmatprep.subr.bf16.mxu0 %v872
        %922 = vmatpush1.bf16.msra.mxu0 %v871
        %923 = vmatprep.subr.bf16.mxu0 %v870
        %924 = vmatpush1.bf16.msra.mxu0 %v869
        %925 = vmatprep.subr.bf16.mxu0 %v868
        %926 = vmatpush1.bf16.msra.mxu0 %v867
        %927 = vmatprep.subr.bf16.mxu0 %v866
        %928 = vmatpush1.bf16.msra.mxu0 %v865
        %929 = vmatprep.subr.bf16.mxu0 %v864
        %930 = vmatpush1.bf16.msra.mxu0 %v863
        %931 = vmatprep.subr.bf16.mxu0 %v862
        %932 = vmatpush1.bf16.msra.mxu0 %v861
        %933 = vmatprep.subr.bf16.mxu0 %v860
        %934 = vmatpush1.bf16.msra.mxu0 %v859
        %935 = vmatprep.subr.bf16.mxu0 %v858
        %936 = vmatpush1.bf16.msra.mxu0 %v857
        %937 = vmatprep.subr.bf16.mxu0 %v888
        %938 = vmatpush2.bf16.msra.mxu0 %v887
        %939 = vmatprep.subr.bf16.mxu0 %v886
        %940 = vmatpush2.bf16.msra.mxu0 %v885
        %941 = vmatprep.subr.bf16.mxu0 %v884
        %942 = vmatpush2.bf16.msra.mxu0 %v883
        %943 = vmatprep.subr.bf16.mxu0 %v882
        %944 = vmatpush2.bf16.msra.mxu0 %v881
        %945 = vmatprep.subr.bf16.mxu0 %v880
        %946 = vmatpush2.bf16.msra.mxu0 %v879
        %947 = vmatprep.subr.bf16.mxu0 %v878
        %948 = vmatpush2.bf16.msra.mxu0 %v877
        %949 = vmatprep.subr.bf16.mxu0 %v876
        %950 = vmatpush2.bf16.msra.mxu0 %v875
        %951 = vmatprep.subr.bf16.mxu0 %v874
        %952 = vmatpush2.bf16.msra.mxu0 %v873
        %953 = vmatprep.mubr.bf16.mxu0 %v748
        %954 = vmatmul.mubr.bf16.gmra.mxu0 %v747
        %v955 = vpop.f32.mrf.mxu0
        %v956 = vadd.f32 %v754, %v955
        %v957 = vpop.f32.mrf.mxu0
        %v958 = vadd.f32 %v758, %v957
        %v959 = vpop.f32.mrf.mxu0
        %v960 = vpop.f32.mrf.mxu0
        %961 = vdwg.mxu0
        %v962 = vmax.f32 %v956, 0.0
        %v963 = vmax.f32 %v958, 0.0
        %v964 = vld [vmem:[#allocation6] sm:$0xff]
        %v965 = vld [vmem:[#allocation6 + $0x8] sm:$0xff]
        %v966 = vld [vmem:[#allocation6 + $0x10] sm:$0xff]
        %v967 = vld [vmem:[#allocation6 + $0x18] sm:$0xff]
        %v968 = vld [vmem:[#allocation6 + $0x20] sm:$0xff]
        %v969 = vld [vmem:[#allocation6 + $0x28] sm:$0xff]
        %v970 = vld [vmem:[#allocation6 + $0x30] sm:$0xff]
        %v971 = vld [vmem:[#allocation6 + $0x38] sm:$0xff]
        %v972 = vld [vmem:[#allocation6 + $0x40] sm:$0xff]
        %v973 = vld [vmem:[#allocation6 + $0x48] sm:$0xff]
        %v974 = vld [vmem:[#allocation6 + $0x50] sm:$0xff]
        %v975 = vld [vmem:[#allocation6 + $0x58] sm:$0xff]
        %v976 = vld [vmem:[#allocation6 + $0x60] sm:$0xff]
        %v977 = vld [vmem:[#allocation6 + $0x68] sm:$0xff]
        %v978 = vld [vmem:[#allocation6 + $0x70] sm:$0xff]
        %v979 = vld [vmem:[#allocation6 + $0x78] sm:$0xff]
        %v980 = vld [vmem:[#allocation6 + $0x80] sm:$0xff]
        %v981 = vld [vmem:[#allocation6 + $0x88] sm:$0xff]
        %v982 = vld [vmem:[#allocation6 + $0x90] sm:$0xff]
        %v983 = vld [vmem:[#allocation6 + $0x98] sm:$0xff]
        %v984 = vld [vmem:[#allocation6 + $0xa0] sm:$0xff]
        %v985 = vld [vmem:[#allocation6 + $0xa8] sm:$0xff]
        %v986 = vld [vmem:[#allocation6 + $0xb0] sm:$0xff]
        %v987 = vld [vmem:[#allocation6 + $0xb8] sm:$0xff]
        %v988 = vld [vmem:[#allocation6 + $0xc0] sm:$0xff]
        %v989 = vld [vmem:[#allocation6 + $0xc8] sm:$0xff]
        %v990 = vld [vmem:[#allocation6 + $0xd0] sm:$0xff]
        %v991 = vld [vmem:[#allocation6 + $0xd8] sm:$0xff]
        %v992 = vld [vmem:[#allocation6 + $0xe0] sm:$0xff]
        %v993 = vld [vmem:[#allocation6 + $0xe8] sm:$0xff]
        %v994 = vld [vmem:[#allocation6 + $0xf0] sm:$0xff]
        %v995 = vld [vmem:[#allocation6 + $0xf8] sm:$0xff]
        %v996 = vpack.c.bf16 %v962, %v962
        %v997 = vpack.c.bf16 %v963, %v963
        %v998 = vld [vmem:[%s6] sm:$0x3]
        %v1000 = vlaneseq
        %v1001 = vshrl.u32 %v1000, 7
        %v1002 = vsub.s32 0, %v1001
        %v1003 = vrot.slane %v998, %v1002
        %v1004 = vlaneseq
        %v1005 = vshrl.u32 %v1004, 7
        %v1006 = vsub.s32 1, %v1005
        %v1007 = vrot.slane %v998, %v1006
        %v1042 = vunpack.c.l.b16 %v964
        %v1043 = vunpack.c.h.b16 %v964
        %v1044 = vunpack.c.l.b16 %v965
        %v1045 = vunpack.c.h.b16 %v965
        %v1046 = vunpack.c.l.b16 %v966
        %v1047 = vunpack.c.h.b16 %v966
        %v1048 = vunpack.c.l.b16 %v967
        %v1049 = vunpack.c.h.b16 %v967
        %v1050 = vunpack.c.l.b16 %v968
        %v1051 = vunpack.c.h.b16 %v968
        %v1052 = vunpack.c.l.b16 %v969
        %v1053 = vunpack.c.h.b16 %v969
        %v1054 = vunpack.c.l.b16 %v970
        %v1055 = vunpack.c.h.b16 %v970
        %v1056 = vunpack.c.l.b16 %v971
        %v1057 = vunpack.c.h.b16 %v971
        %v1058 = vunpack.c.l.b16 %v972
        %v1059 = vunpack.c.h.b16 %v972
        %v1060 = vunpack.c.l.b16 %v973
        %v1061 = vunpack.c.h.b16 %v973
        %v1062 = vunpack.c.l.b16 %v974
        %v1063 = vunpack.c.h.b16 %v974
        %v1064 = vunpack.c.l.b16 %v975
        %v1065 = vunpack.c.h.b16 %v975
        %v1066 = vunpack.c.l.b16 %v976
        %v1067 = vunpack.c.h.b16 %v976
        %v1068 = vunpack.c.l.b16 %v977
        %v1069 = vunpack.c.h.b16 %v977
        %v1070 = vunpack.c.l.b16 %v978
        %v1071 = vunpack.c.h.b16 %v978
        %v1072 = vunpack.c.l.b16 %v979
        %v1073 = vunpack.c.h.b16 %v979
        %v1074 = vunpack.c.l.b16 %v980
        %v1075 = vunpack.c.h.b16 %v980
        %v1076 = vunpack.c.l.b16 %v981
        %v1077 = vunpack.c.h.b16 %v981
        %v1078 = vunpack.c.l.b16 %v982
        %v1079 = vunpack.c.h.b16 %v982
        %v1080 = vunpack.c.l.b16 %v983
        %v1081 = vunpack.c.h.b16 %v983
        %v1082 = vunpack.c.l.b16 %v984
        %v1083 = vunpack.c.h.b16 %v984
        %v1084 = vunpack.c.l.b16 %v985
        %v1085 = vunpack.c.h.b16 %v985
        %v1086 = vunpack.c.l.b16 %v986
        %v1087 = vunpack.c.h.b16 %v986
        %v1088 = vunpack.c.l.b16 %v987
        %v1089 = vunpack.c.h.b16 %v987
        %v1090 = vunpack.c.l.b16 %v988
        %v1091 = vunpack.c.h.b16 %v988
        %v1092 = vunpack.c.l.b16 %v989
        %v1093 = vunpack.c.h.b16 %v989
        %v1094 = vunpack.c.l.b16 %v990
        %v1095 = vunpack.c.h.b16 %v990
        %v1096 = vunpack.c.l.b16 %v991
        %v1097 = vunpack.c.h.b16 %v991
        %v1098 = vunpack.c.l.b16 %v992
        %v1099 = vunpack.c.h.b16 %v992
        %v1100 = vunpack.c.l.b16 %v993
        %v1101 = vunpack.c.h.b16 %v993
        %v1102 = vunpack.c.l.b16 %v994
        %v1103 = vunpack.c.h.b16 %v994
        %v1104 = vunpack.c.l.b16 %v995
        %v1105 = vunpack.c.h.b16 %v995
        %v1106 = vpack.c.b16 %v1044, %v1042
        %v1107 = vpack.c.b16 %v1045, %v1043
        %v1108 = vpack.c.b16 %v1048, %v1046
        %v1109 = vpack.c.b16 %v1049, %v1047
        %v1110 = vpack.c.b16 %v1052, %v1050
        %v1111 = vpack.c.b16 %v1053, %v1051
        %v1112 = vpack.c.b16 %v1056, %v1054
        %v1113 = vpack.c.b16 %v1057, %v1055
        %v1114 = vpack.c.b16 %v1060, %v1058
        %v1115 = vpack.c.b16 %v1061, %v1059
        %v1116 = vpack.c.b16 %v1064, %v1062
        %v1117 = vpack.c.b16 %v1065, %v1063
        %v1118 = vpack.c.b16 %v1068, %v1066
        %v1119 = vpack.c.b16 %v1069, %v1067
        %v1120 = vpack.c.b16 %v1072, %v1070
        %v1121 = vpack.c.b16 %v1073, %v1071
        %v1122 = vpack.c.b16 %v1076, %v1074
        %v1123 = vpack.c.b16 %v1077, %v1075
        %v1124 = vpack.c.b16 %v1080, %v1078
        %v1125 = vpack.c.b16 %v1081, %v1079
        %v1126 = vpack.c.b16 %v1084, %v1082
        %v1127 = vpack.c.b16 %v1085, %v1083
        %v1128 = vpack.c.b16 %v1088, %v1086
        %v1129 = vpack.c.b16 %v1089, %v1087
        %v1130 = vpack.c.b16 %v1092, %v1090
        %v1131 = vpack.c.b16 %v1093, %v1091
        %v1132 = vpack.c.b16 %v1096, %v1094
        %v1133 = vpack.c.b16 %v1097, %v1095
        %v1134 = vpack.c.b16 %v1100, %v1098
        %v1135 = vpack.c.b16 %v1101, %v1099
        %v1136 = vpack.c.b16 %v1104, %v1102
        %v1137 = vpack.c.b16 %v1105, %v1103
        %1170 = vmatprep.subr.bf16.mxu0 %v1121
        %1171 = vmatpush1.bf16.msra.mxu0 %v1120
        %1172 = vmatprep.subr.bf16.mxu0 %v1119
        %1173 = vmatpush1.bf16.msra.mxu0 %v1118
        %1174 = vmatprep.subr.bf16.mxu0 %v1117
        %1175 = vmatpush1.bf16.msra.mxu0 %v1116
        %1176 = vmatprep.subr.bf16.mxu0 %v1115
        %1177 = vmatpush1.bf16.msra.mxu0 %v1114
        %1178 = vmatprep.subr.bf16.mxu0 %v1113
        %1179 = vmatpush1.bf16.msra.mxu0 %v1112
        %1180 = vmatprep.subr.bf16.mxu0 %v1111
        %1181 = vmatpush1.bf16.msra.mxu0 %v1110
        %1182 = vmatprep.subr.bf16.mxu0 %v1109
        %1183 = vmatpush1.bf16.msra.mxu0 %v1108
        %1184 = vmatprep.subr.bf16.mxu0 %v1107
        %1185 = vmatpush1.bf16.msra.mxu0 %v1106
        %1186 = vmatprep.subr.bf16.mxu0 %v1137
        %1187 = vmatpush2.bf16.msra.mxu0 %v1136
        %1188 = vmatprep.subr.bf16.mxu0 %v1135
        %1189 = vmatpush2.bf16.msra.mxu0 %v1134
        %1190 = vmatprep.subr.bf16.mxu0 %v1133
        %1191 = vmatpush2.bf16.msra.mxu0 %v1132
        %1192 = vmatprep.subr.bf16.mxu0 %v1131
        %1193 = vmatpush2.bf16.msra.mxu0 %v1130
        %1194 = vmatprep.subr.bf16.mxu0 %v1129
        %1195 = vmatpush2.bf16.msra.mxu0 %v1128
        %1196 = vmatprep.subr.bf16.mxu0 %v1127
        %1197 = vmatpush2.bf16.msra.mxu0 %v1126
        %1198 = vmatprep.subr.bf16.mxu0 %v1125
        %1199 = vmatpush2.bf16.msra.mxu0 %v1124
        %1200 = vmatprep.subr.bf16.mxu0 %v1123
        %1201 = vmatpush2.bf16.msra.mxu0 %v1122
        %1202 = vmatprep.mubr.bf16.mxu0 %v997
        %1203 = vmatmul.mubr.bf16.gmra.mxu0 %v996
        %v1204 = vpop.f32.mrf.mxu0
        %v1205 = vadd.f32 %v1003, %v1204
        %v1206 = vpop.f32.mrf.mxu0
        %v1207 = vadd.f32 %v1007, %v1206
        %v1208 = vpop.f32.mrf.mxu0
        %v1209 = vpop.f32.mrf.mxu0
        %1210 = vdwg.mxu0
        %v1211 = vmax.f32 %v1205, 0.0
        %v1212 = vmax.f32 %v1207, 0.0
        %v1213 = vld [vmem:[#allocation9] sm:$0xff]
        %v1214 = vld [vmem:[#allocation9 + $0x8] sm:$0xff]
        %v1215 = vld [vmem:[#allocation9 + $0x10] sm:$0xff]
        %v1216 = vld [vmem:[#allocation9 + $0x18] sm:$0xff]
        %v1217 = vld [vmem:[#allocation9 + $0x20] sm:$0xff]
        %v1218 = vld [vmem:[#allocation9 + $0x28] sm:$0xff]
        %v1219 = vld [vmem:[#allocation9 + $0x30] sm:$0xff]
        %v1220 = vld [vmem:[#allocation9 + $0x38] sm:$0xff]
        %v1221 = vld [vmem:[#allocation9 + $0x40] sm:$0xff]
        %v1222 = vld [vmem:[#allocation9 + $0x48] sm:$0xff]
        %v1223 = vld [vmem:[#allocation9 + $0x50] sm:$0xff]
        %v1224 = vld [vmem:[#allocation9 + $0x58] sm:$0xff]
        %v1225 = vld [vmem:[#allocation9 + $0x60] sm:$0xff]
        %v1226 = vld [vmem:[#allocation9 + $0x68] sm:$0xff]
        %v1227 = vld [vmem:[#allocation9 + $0x70] sm:$0xff]
        %v1228 = vld [vmem:[#allocation9 + $0x78] sm:$0xff]
        %v1229 = vld [vmem:[#allocation9 + $0x80] sm:$0xff]
        %v1230 = vld [vmem:[#allocation9 + $0x88] sm:$0xff]
        %v1231 = vld [vmem:[#allocation9 + $0x90] sm:$0xff]
        %v1232 = vld [vmem:[#allocation9 + $0x98] sm:$0xff]
        %v1233 = vld [vmem:[#allocation9 + $0xa0] sm:$0xff]
        %v1234 = vld [vmem:[#allocation9 + $0xa8] sm:$0xff]
        %v1235 = vld [vmem:[#allocation9 + $0xb0] sm:$0xff]
        %v1236 = vld [vmem:[#allocation9 + $0xb8] sm:$0xff]
        %v1237 = vld [vmem:[#allocation9 + $0xc0] sm:$0xff]
        %v1238 = vld [vmem:[#allocation9 + $0xc8] sm:$0xff]
        %v1239 = vld [vmem:[#allocation9 + $0xd0] sm:$0xff]
        %v1240 = vld [vmem:[#allocation9 + $0xd8] sm:$0xff]
        %v1241 = vld [vmem:[#allocation9 + $0xe0] sm:$0xff]
        %v1242 = vld [vmem:[#allocation9 + $0xe8] sm:$0xff]
        %v1243 = vld [vmem:[#allocation9 + $0xf0] sm:$0xff]
        %v1244 = vld [vmem:[#allocation9 + $0xf8] sm:$0xff]
        %v1245 = vpack.c.bf16 %v1211, %v1211
        %v1246 = vpack.c.bf16 %v1212, %v1212
        %v1247 = vld [vmem:[%s8] sm:$0x3]
        %v1249 = vlaneseq
        %v1250 = vshrl.u32 %v1249, 7
        %v1251 = vsub.s32 0, %v1250
        %v1252 = vrot.slane %v1247, %v1251
        %v1253 = vlaneseq
        %v1254 = vshrl.u32 %v1253, 7
        %v1255 = vsub.s32 1, %v1254
        %v1256 = vrot.slane %v1247, %v1255
        %v1291 = vunpack.c.l.b16 %v1213
        %v1292 = vunpack.c.h.b16 %v1213
        %v1293 = vunpack.c.l.b16 %v1214
        %v1294 = vunpack.c.h.b16 %v1214
        %v1295 = vunpack.c.l.b16 %v1215
        %v1296 = vunpack.c.h.b16 %v1215
        %v1297 = vunpack.c.l.b16 %v1216
        %v1298 = vunpack.c.h.b16 %v1216
        %v1299 = vunpack.c.l.b16 %v1217
        %v1300 = vunpack.c.h.b16 %v1217
        %v1301 = vunpack.c.l.b16 %v1218
        %v1302 = vunpack.c.h.b16 %v1218
        %v1303 = vunpack.c.l.b16 %v1219
        %v1304 = vunpack.c.h.b16 %v1219
        %v1305 = vunpack.c.l.b16 %v1220
        %v1306 = vunpack.c.h.b16 %v1220
        %v1307 = vunpack.c.l.b16 %v1221
        %v1308 = vunpack.c.h.b16 %v1221
        %v1309 = vunpack.c.l.b16 %v1222
        %v1310 = vunpack.c.h.b16 %v1222
        %v1311 = vunpack.c.l.b16 %v1223
        %v1312 = vunpack.c.h.b16 %v1223
        %v1313 = vunpack.c.l.b16 %v1224
        %v1314 = vunpack.c.h.b16 %v1224
        %v1315 = vunpack.c.l.b16 %v1225
        %v1316 = vunpack.c.h.b16 %v1225
        %v1317 = vunpack.c.l.b16 %v1226
        %v1318 = vunpack.c.h.b16 %v1226
        %v1319 = vunpack.c.l.b16 %v1227
        %v1320 = vunpack.c.h.b16 %v1227
        %v1321 = vunpack.c.l.b16 %v1228
        %v1322 = vunpack.c.h.b16 %v1228
        %v1323 = vunpack.c.l.b16 %v1229
        %v1324 = vunpack.c.h.b16 %v1229
        %v1325 = vunpack.c.l.b16 %v1230
        %v1326 = vunpack.c.h.b16 %v1230
        %v1327 = vunpack.c.l.b16 %v1231
        %v1328 = vunpack.c.h.b16 %v1231
        %v1329 = vunpack.c.l.b16 %v1232
        %v1330 = vunpack.c.h.b16 %v1232
        %v1331 = vunpack.c.l.b16 %v1233
        %v1332 = vunpack.c.h.b16 %v1233
        %v1333 = vunpack.c.l.b16 %v1234
        %v1334 = vunpack.c.h.b16 %v1234
        %v1335 = vunpack.c.l.b16 %v1235
        %v1336 = vunpack.c.h.b16 %v1235
        %v1337 = vunpack.c.l.b16 %v1236
        %v1338 = vunpack.c.h.b16 %v1236
        %v1339 = vunpack.c.l.b16 %v1237
        %v1340 = vunpack.c.h.b16 %v1237
        %v1341 = vunpack.c.l.b16 %v1238
        %v1342 = vunpack.c.h.b16 %v1238
        %v1343 = vunpack.c.l.b16 %v1239
        %v1344 = vunpack.c.h.b16 %v1239
        %v1345 = vunpack.c.l.b16 %v1240
        %v1346 = vunpack.c.h.b16 %v1240
        %v1347 = vunpack.c.l.b16 %v1241
        %v1348 = vunpack.c.h.b16 %v1241
        %v1349 = vunpack.c.l.b16 %v1242
        %v1350 = vunpack.c.h.b16 %v1242
        %v1351 = vunpack.c.l.b16 %v1243
        %v1352 = vunpack.c.h.b16 %v1243
        %v1353 = vunpack.c.l.b16 %v1244
        %v1354 = vunpack.c.h.b16 %v1244
        %v1355 = vpack.c.b16 %v1293, %v1291
        %v1356 = vpack.c.b16 %v1294, %v1292
        %v1357 = vpack.c.b16 %v1297, %v1295
        %v1358 = vpack.c.b16 %v1298, %v1296
        %v1359 = vpack.c.b16 %v1301, %v1299
        %v1360 = vpack.c.b16 %v1302, %v1300
        %v1361 = vpack.c.b16 %v1305, %v1303
        %v1362 = vpack.c.b16 %v1306, %v1304
        %v1363 = vpack.c.b16 %v1309, %v1307
        %v1364 = vpack.c.b16 %v1310, %v1308
        %v1365 = vpack.c.b16 %v1313, %v1311
        %v1366 = vpack.c.b16 %v1314, %v1312
        %v1367 = vpack.c.b16 %v1317, %v1315
        %v1368 = vpack.c.b16 %v1318, %v1316
        %v1369 = vpack.c.b16 %v1321, %v1319
        %v1370 = vpack.c.b16 %v1322, %v1320
        %v1371 = vpack.c.b16 %v1325, %v1323
        %v1372 = vpack.c.b16 %v1326, %v1324
        %v1373 = vpack.c.b16 %v1329, %v1327
        %v1374 = vpack.c.b16 %v1330, %v1328
        %v1375 = vpack.c.b16 %v1333, %v1331
        %v1376 = vpack.c.b16 %v1334, %v1332
        %v1377 = vpack.c.b16 %v1337, %v1335
        %v1378 = vpack.c.b16 %v1338, %v1336
        %v1379 = vpack.c.b16 %v1341, %v1339
        %v1380 = vpack.c.b16 %v1342, %v1340
        %v1381 = vpack.c.b16 %v1345, %v1343
        %v1382 = vpack.c.b16 %v1346, %v1344
        %v1383 = vpack.c.b16 %v1349, %v1347
        %v1384 = vpack.c.b16 %v1350, %v1348
        %v1385 = vpack.c.b16 %v1353, %v1351
        %v1386 = vpack.c.b16 %v1354, %v1352
        %1419 = vmatprep.subr.bf16.mxu0 %v1370
        %1420 = vmatpush1.bf16.msra.mxu0 %v1369
        %1421 = vmatprep.subr.bf16.mxu0 %v1368
        %1422 = vmatpush1.bf16.msra.mxu0 %v1367
        %1423 = vmatprep.subr.bf16.mxu0 %v1366
        %1424 = vmatpush1.bf16.msra.mxu0 %v1365
        %1425 = vmatprep.subr.bf16.mxu0 %v1364
        %1426 = vmatpush1.bf16.msra.mxu0 %v1363
        %1427 = vmatprep.subr.bf16.mxu0 %v1362
        %1428 = vmatpush1.bf16.msra.mxu0 %v1361
        %1429 = vmatprep.subr.bf16.mxu0 %v1360
        %1430 = vmatpush1.bf16.msra.mxu0 %v1359
        %1431 = vmatprep.subr.bf16.mxu0 %v1358
        %1432 = vmatpush1.bf16.msra.mxu0 %v1357
        %1433 = vmatprep.subr.bf16.mxu0 %v1356
        %1434 = vmatpush1.bf16.msra.mxu0 %v1355
        %1435 = vmatprep.subr.bf16.mxu0 %v1386
        %1436 = vmatpush2.bf16.msra.mxu0 %v1385
        %1437 = vmatprep.subr.bf16.mxu0 %v1384
        %1438 = vmatpush2.bf16.msra.mxu0 %v1383
        %1439 = vmatprep.subr.bf16.mxu0 %v1382
        %1440 = vmatpush2.bf16.msra.mxu0 %v1381
        %1441 = vmatprep.subr.bf16.mxu0 %v1380
        %1442 = vmatpush2.bf16.msra.mxu0 %v1379
        %1443 = vmatprep.subr.bf16.mxu0 %v1378
        %1444 = vmatpush2.bf16.msra.mxu0 %v1377
        %1445 = vmatprep.subr.bf16.mxu0 %v1376
        %1446 = vmatpush2.bf16.msra.mxu0 %v1375
        %1447 = vmatprep.subr.bf16.mxu0 %v1374
        %1448 = vmatpush2.bf16.msra.mxu0 %v1373
        %1449 = vmatprep.subr.bf16.mxu0 %v1372
        %1450 = vmatpush2.bf16.msra.mxu0 %v1371
        %1451 = vmatprep.mubr.bf16.mxu0 %v1246
        %1452 = vmatmul.mubr.bf16.gmra.mxu0 %v1245
        %v1453 = vpop.f32.mrf.mxu0
        %v1454 = vadd.f32 %v1252, %v1453
        %v1455 = vpop.f32.mrf.mxu0
        %v1456 = vadd.f32 %v1256, %v1455
        %v1457 = vpop.f32.mrf.mxu0
        %v1458 = vpop.f32.mrf.mxu0
        %1459 = vdwg.mxu0
        %v1460 = vmax.f32 %v1454, 0.0
        %v1461 = vmax.f32 %v1456, 0.0
        %v1462 = vld [vmem:[#allocation11] sm:$0xf]
        %v1463 = vld [vmem:[#allocation11 + $0x4] sm:$0xf]
        %v1464 = vld [vmem:[#allocation11 + $0x8] sm:$0xf]
        %v1465 = vld [vmem:[#allocation11 + $0xc] sm:$0xf]
        %v1466 = vld [vmem:[#allocation11 + $0x10] sm:$0xf]
        %v1467 = vld [vmem:[#allocation11 + $0x14] sm:$0xf]
        %v1468 = vld [vmem:[#allocation11 + $0x18] sm:$0xf]
        %v1469 = vld [vmem:[#allocation11 + $0x1c] sm:$0xf]
        %v1470 = vld [vmem:[#allocation11 + $0x20] sm:$0xf]
        %v1471 = vld [vmem:[#allocation11 + $0x24] sm:$0xf]
        %v1472 = vld [vmem:[#allocation11 + $0x28] sm:$0xf]
        %v1473 = vld [vmem:[#allocation11 + $0x2c] sm:$0xf]
        %v1474 = vld [vmem:[#allocation11 + $0x30] sm:$0xf]
        %v1475 = vld [vmem:[#allocation11 + $0x34] sm:$0xf]
        %v1476 = vld [vmem:[#allocation11 + $0x38] sm:$0xf]
        %v1477 = vld [vmem:[#allocation11 + $0x3c] sm:$0xf]
        %v1478 = vld [vmem:[#allocation11 + $0x40] sm:$0xf]
        %v1479 = vld [vmem:[#allocation11 + $0x44] sm:$0xf]
        %v1480 = vld [vmem:[#allocation11 + $0x48] sm:$0xf]
        %v1481 = vld [vmem:[#allocation11 + $0x4c] sm:$0xf]
        %v1482 = vld [vmem:[#allocation11 + $0x50] sm:$0xf]
        %v1483 = vld [vmem:[#allocation11 + $0x54] sm:$0xf]
        %v1484 = vld [vmem:[#allocation11 + $0x58] sm:$0xf]
        %v1485 = vld [vmem:[#allocation11 + $0x5c] sm:$0xf]
        %v1486 = vld [vmem:[#allocation11 + $0x60] sm:$0xf]
        %v1487 = vld [vmem:[#allocation11 + $0x64] sm:$0xf]
        %v1488 = vld [vmem:[#allocation11 + $0x68] sm:$0xf]
        %v1489 = vld [vmem:[#allocation11 + $0x6c] sm:$0xf]
        %v1490 = vld [vmem:[#allocation11 + $0x70] sm:$0xf]
        %v1491 = vld [vmem:[#allocation11 + $0x74] sm:$0xf]
        %v1492 = vld [vmem:[#allocation11 + $0x78] sm:$0xf]
        %v1493 = vld [vmem:[#allocation11 + $0x7c] sm:$0xf]
        %v1494 = vpack.c.bf16 %v1460, %v1460
        %v1495 = vpack.c.bf16 %v1461, %v1461
        %v1496 = vld [vmem:[%s10] sm:$0x1]
        %v1498 = vlaneseq
        %v1499 = vshrl.u32 %v1498, 7
        %v1500 = vsub.s32 0, %v1499
        %v1501 = vrot.slane %v1496, %v1500
        %v1535 = vunpack.c.l.b16 %v1462
        %v1536 = vunpack.c.l.b16 %v1463
        %v1537 = vunpack.c.l.b16 %v1464
        %v1538 = vunpack.c.l.b16 %v1465
        %v1539 = vunpack.c.l.b16 %v1466
        %v1540 = vunpack.c.l.b16 %v1467
        %v1541 = vunpack.c.l.b16 %v1468
        %v1542 = vunpack.c.l.b16 %v1469
        %v1543 = vunpack.c.l.b16 %v1470
        %v1544 = vunpack.c.l.b16 %v1471
        %v1545 = vunpack.c.l.b16 %v1472
        %v1546 = vunpack.c.l.b16 %v1473
        %v1547 = vunpack.c.l.b16 %v1474
        %v1548 = vunpack.c.l.b16 %v1475
        %v1549 = vunpack.c.l.b16 %v1476
        %v1550 = vunpack.c.l.b16 %v1477
        %v1551 = vunpack.c.l.b16 %v1478
        %v1552 = vunpack.c.l.b16 %v1479
        %v1553 = vunpack.c.l.b16 %v1480
        %v1554 = vunpack.c.l.b16 %v1481
        %v1555 = vunpack.c.l.b16 %v1482
        %v1556 = vunpack.c.l.b16 %v1483
        %v1557 = vunpack.c.l.b16 %v1484
        %v1558 = vunpack.c.l.b16 %v1485
        %v1559 = vunpack.c.l.b16 %v1486
        %v1560 = vunpack.c.l.b16 %v1487
        %v1561 = vunpack.c.l.b16 %v1488
        %v1562 = vunpack.c.l.b16 %v1489
        %v1563 = vunpack.c.l.b16 %v1490
        %v1564 = vunpack.c.l.b16 %v1491
        %v1565 = vunpack.c.l.b16 %v1492
        %v1566 = vunpack.c.l.b16 %v1493
        %v1567 = vpack.c.b16 %v1536, %v1535
        %v1568 = vpack.c.b16 %v1538, %v1537
        %v1569 = vpack.c.b16 %v1540, %v1539
        %v1570 = vpack.c.b16 %v1542, %v1541
        %v1571 = vpack.c.b16 %v1544, %v1543
        %v1572 = vpack.c.b16 %v1546, %v1545
        %v1573 = vpack.c.b16 %v1548, %v1547
        %v1574 = vpack.c.b16 %v1550, %v1549
        %v1575 = vpack.c.b16 %v1552, %v1551
        %v1576 = vpack.c.b16 %v1554, %v1553
        %v1577 = vpack.c.b16 %v1556, %v1555
        %v1578 = vpack.c.b16 %v1558, %v1557
        %v1579 = vpack.c.b16 %v1560, %v1559
        %v1580 = vpack.c.b16 %v1562, %v1561
        %v1581 = vpack.c.b16 %v1564, %v1563
        %v1582 = vpack.c.b16 %v1566, %v1565
        %1599 = vmatprep.subr.bf16.mxu0 0
        %1600 = vmatpush1.bf16.msra.mxu0 %v1574
        %1601 = vmatprep.subr.bf16.mxu0 0
        %1602 = vmatpush1.bf16.msra.mxu0 %v1573
        %1603 = vmatprep.subr.bf16.mxu0 0
        %1604 = vmatpush1.bf16.msra.mxu0 %v1572
        %1605 = vmatprep.subr.bf16.mxu0 0
        %1606 = vmatpush1.bf16.msra.mxu0 %v1571
        %1607 = vmatprep.subr.bf16.mxu0 0
        %1608 = vmatpush1.bf16.msra.mxu0 %v1570
        %1609 = vmatprep.subr.bf16.mxu0 0
        %1610 = vmatpush1.bf16.msra.mxu0 %v1569
        %1611 = vmatprep.subr.bf16.mxu0 0
        %1612 = vmatpush1.bf16.msra.mxu0 %v1568
        %1613 = vmatprep.subr.bf16.mxu0 0
        %1614 = vmatpush1.bf16.msra.mxu0 %v1567
        %1615 = vmatprep.subr.bf16.mxu0 0
        %1616 = vmatpush2.bf16.msra.mxu0 %v1582
        %1617 = vmatprep.subr.bf16.mxu0 0
        %1618 = vmatpush2.bf16.msra.mxu0 %v1581
        %1619 = vmatprep.subr.bf16.mxu0 0
        %1620 = vmatpush2.bf16.msra.mxu0 %v1580
        %1621 = vmatprep.subr.bf16.mxu0 0
        %1622 = vmatpush2.bf16.msra.mxu0 %v1579
        %1623 = vmatprep.subr.bf16.mxu0 0
        %1624 = vmatpush2.bf16.msra.mxu0 %v1578
        %1625 = vmatprep.subr.bf16.mxu0 0
        %1626 = vmatpush2.bf16.msra.mxu0 %v1577
        %1627 = vmatprep.subr.bf16.mxu0 0
        %1628 = vmatpush2.bf16.msra.mxu0 %v1576
        %1629 = vmatprep.subr.bf16.mxu0 0
        %1630 = vmatpush2.bf16.msra.mxu0 %v1575
        %1631 = vmatprep.mubr.bf16.mxu0 %v1495
        %1632 = vmatmul.mubr.bf16.gmra.mxu0 %v1494
        %v1633 = vpop.f32.mrf.mxu0
        %v1634 = vadd.f32 %v1501, %v1633
        %v1635 = vpop.f32.mrf.mxu0
        %v1636 = vpop.f32.mrf.mxu0
        %v1637 = vpop.f32.mrf.mxu0
        %1638 = vdwg.mxu0
        %1639 = vst [vmem:[%s404] sm:$0xff] %v1634
        %s1640 = sand.u32 %s256, 1
        %s1641 = scalar_lea.sflag [#allocation8], %s1640
        %s1642 = sand.u32 %s256, 1
        %s1643 = smul.addr %s1642, 8
        %s1644 = scalar_lea.vmem [#allocation12], %s1643
        // Predicated region
        $region73: #{tpu_custom_call.1} parent=59 // pred_check
          %p1645 = pneg %p266
        $region74: #{tpu_custom_call.1} parent=59 // pred_check_branch
          %1647 = sbr.rel (%p1645) target = $region76
        $region75: #{tpu_custom_call.1} parent=59 // pred_region
          %s1649 = ssub.s32 128, 128
          %1650 = vsyncadd %s1641, %s1649
          %s1651 = smul.addr %s33, 128
          %s1652 = scalar_lea.hbm %s11, %s1651
          %s1654 = sshll.u32 %s1644, 4
          %s1655 = int_to_ptr.vmem [resolvable:$true] %s1654
          %1657 = dma.vmem_to_hbm [thread:$0]  %s1655, 128, %s1652, %s1641
        $region76: #{tpu_custom_call.1} parent=59 // pred_fallthru
          _
      $region60: #{tpu_custom_call.1} parent=5 // pred_fallthru
        _
      %p1658 = scmp.le.s32.totalorder 2, %s28
      // Predicated region
      $region77: #{tpu_custom_call.1} parent=5 // pred_check
        %p1659 = pneg %p1658
      $region78: #{tpu_custom_call.1} parent=5 // pred_check_branch
        %1661 = sbr.rel (%p1659) target = $region80
      $region79: #{tpu_custom_call.1} parent=5 // pred_region
        %s1662 = ssub.s32 %s28, 2
        // Predicated region
        $region81: #{tpu_custom_call.1} parent=79 // pred_check
          %p1663 = pneg %p272
        $region82: #{tpu_custom_call.1} parent=79 // pred_check_branch
          %1665 = sbr.rel (%p1663) target = $region84
        $region83: #{tpu_custom_call.1} parent=79 // pred_region
          %s1666 = sand.u32 %s257, 1
          %s1667 = scalar_lea.sflag [#allocation8], %s1666
          %s1668 = sand.u32 %s257, 1
          %s1669 = smul.addr %s1668, 8
          %s1670 = scalar_lea.vmem [#allocation12], %s1669
          %1671 = dma.done %s1667, 128
        $region84: #{tpu_custom_call.1} parent=79 // pred_fallthru
          _
      $region80: #{tpu_custom_call.1} parent=5 // pred_fallthru
        _
    $region6: #{tpu_custom_call.1} parent=1 // loop_footer
      %s32 = sadd.s32 1, %s28
    $region7: #{tpu_custom_call.1} parent=1 // loop_footer_branch
      %27 = sbr.rel target = $region3
    $region8: #{tpu_custom_call.1} parent=1 // loop_exit
      _
    %1672 = vsyncpa [#allocation7], 1
    %s1673 = scalar_lea.sflag [#allocation7], 1
    %1674 = vsyncpa %s1673, 1
    %1675 = vsyncpa [#allocation10], 1
    %1676 = vsyncpa [#allocation8], 1
    %s1677 = scalar_lea.sflag [#allocation8], 1
    %1678 = vsyncpa %s1677, 1

</llo_original>
